<compile_context>
chip_gen: v7x
topology: tpu7x:2x2x1
jax: 0.10.0
libtpu: 0.0.40
codegen_flags: <defaults>
</compile_context>

<pallas_src>
import functools
import math

import jax
import jax.numpy as jnp
from jax.experimental import pallas as pl
from jax.experimental.pallas import tpu as pltpu

# gpytorch defaults: raw_lengthscale = raw_outputscale = 0, Positive() constraint
# is softplus, so both equal ln(2).
LENGTHSCALE = math.log(2.0)
OUTPUTSCALE = math.log(2.0)


def _round_up(x, m):
    return (x + m - 1) // m * m


# ----------------------------------------------------------------------------
# GP prior terms (plain JAX glue: [L,L] covariance + dense linalg).
# ----------------------------------------------------------------------------
def gp_prior_terms(t, lat):
    # NOTE: ddof=1 (unbiased) matches torch.std(); lat==1 would divide by zero,
    # exactly like the PyTorch reference.
    t = t.astype(jnp.float32)
    t_norm = (t - t.mean()) / jnp.std(t, ddof=1)
    diff = (t_norm[:, None] - t_norm[None, :]) / LENGTHSCALE
    cov = OUTPUTSCALE * jnp.exp(-0.5 * diff * diff)
    # TODO(synk): cholesky / inverse / logdet of the small [L,L] GP covariance
    # stay in plain JAX — dense linalg has no clean Pallas equivalent.
    chol = jnp.linalg.cholesky(cov)
    logdet = 2.0 * jnp.sum(jnp.log(jnp.diagonal(chol)))
    cov_inv = jax.scipy.linalg.cho_solve(
        (chol, True), jnp.eye(lat, dtype=jnp.float32)
    )
    diag_covinv = jnp.diagonal(cov_inv).reshape(lat, 1)
    return cov_inv, diag_covinv, logdet


# ----------------------------------------------------------------------------
# Fused encoder -> reparameterize -> decoder -> per-tile scalar KL partial.
# One grid step processes a (., TM) slab of the batch (batch on lanes);
# weights/biases/cov_inv are VMEM-resident across steps.
# ----------------------------------------------------------------------------
def gpvae_kernel(
    x_ref, eps_ref,
    we1_ref, be1_ref,
    we2_ref, be2_ref,
    wd1_ref, bd1_ref,
    wd2_ref, bd2_ref,
    covinv_ref, dcovinv_ref,
    recon_ref, mu_ref, logvar_ref, kl_ref,
    *, n_valid,
):
    bf = jnp.bfloat16
    lat = mu_ref.shape[0]
    tm = x_ref.shape[1]

    # ---- Encoder MLP (bf16 operands, f32 accumulation), batch on lanes ----
    h = jnp.dot(we1_ref[...], x_ref[...], preferred_element_type=jnp.float32)
    h = jnp.maximum(h + be1_ref[...], 0.0).astype(bf)                 # [hdim, tm]
    enc = jnp.dot(we2_ref[...], h, preferred_element_type=jnp.float32) + be2_ref[...]
    mu = enc[:lat]                     # free sublane-row view at L (f32)
    logvar = enc[lat:]                                                 # [lat, tm]

    # ---- Reparameterization (f32 elementwise) ----
    std = jnp.exp(0.5 * logvar)
    z = mu + eps_ref[...].astype(jnp.float32) * std                    # [lat, tm]

    # ---- Decoder MLP ----
    hd = jnp.dot(wd1_ref[...], z.astype(bf), preferred_element_type=jnp.float32)
    hd = jnp.maximum(hd + bd1_ref[...], 0.0).astype(bf)                # [hdim, tm]
    recon = (
        jnp.dot(wd2_ref[...], hd, preferred_element_type=jnp.float32) + bd2_ref[...]
    )                                                                  # [d, tm]

    # Lane-dense bf16 stores; KL math below stays f32.
    recon_ref[...] = recon.astype(recon_ref.dtype)
    mu_ref[...] = mu.astype(mu_ref.dtype)
    logvar_ref[...] = logvar.astype(logvar_ref.dtype)

    # ---- KL(q || N(0, cov)) per-column, masked and reduced to one scalar.
    # The constant 0.5*(logdet - L) per row is added in the wrapper.
    var_q = std * std                                     # reuse the reparam exp
    trace_term = jnp.sum(var_q * dcovinv_ref[...], axis=0, keepdims=True)
    quad = jnp.sum(
        jnp.dot(covinv_ref[...], mu, preferred_element_type=jnp.float32) * mu,
        axis=0, keepdims=True,
    )
    sum_logvar = jnp.sum(logvar, axis=0, keepdims=True)
    kl_cols = 0.5 * (trace_term + quad - sum_logvar)                   # [1, tm]

    col = pl.program_id(0) * tm + jax.lax.broadcasted_iota(jnp.int32, (1, tm), 1)
    valid = col < n_valid                                  # mask padded columns
    kl_ref[0] = jnp.sum(jnp.where(valid, kl_cols, 0.0), axis=1, keepdims=True)


def _choose_tiling(n, block_m):
    """Pick (tm, n_pad, grid): lane-multiple tiles, even grid for v7x balance."""
    n128 = _round_up(max(n, 1), 128)
    block_m = max(128, _round_up(block_m, 128))
    if n128 <= block_m:
        return n128, n128, 1                    # single full-batch tile
    grid = pl.cdiv(n128, block_m)
    if grid % 2:
        grid += 1                               # balance v7x's two TensorCores
    tm = _round_up(pl.cdiv(n128, grid), 128)
    return tm, tm * grid, grid


def gpvae_forward(params, x, t, eps, *, block_m=1024):
    n, d = x.shape
    hdim = params["we1"].shape[1]
    lat = params["we2"].shape[1] // 2
    assert t.shape[0] == lat, "GP prior covariance must be [latent_dim, latent_dim]"

    cov_inv, diag_covinv, logdet = gp_prior_terms(t, lat)

    tm, n_pad, grid_n = _choose_tiling(n, block_m)

    bf = jnp.bfloat16
    # Batch-on-lanes layout, single jnp.pad (no zeros+scatter).
    x_t = jnp.pad(x.T.astype(bf), ((0, 0), (0, n_pad - n)))        # [d,   n_pad]
    eps_t = jnp.pad(eps.T.astype(bf), ((0, 0), (0, n_pad - n)))    # [lat, n_pad]

    args = (
        x_t, eps_t,
        params["we1"].T.astype(bf),                                 # [hdim, d]
        params["be1"].reshape(hdim, 1).astype(jnp.float32),
        params["we2"].T.astype(bf),                                 # [2L, hdim]
        params["be2"].reshape(2 * lat, 1).astype(jnp.float32),
        params["wd1"].T.astype(bf),                                 # [hdim, lat]
        params["bd1"].reshape(hdim, 1).astype(jnp.float32),
        params["wd2"].T.astype(bf),                                 # [d, hdim]
        params["bd2"].reshape(d, 1).astype(jnp.float32),
        cov_inv.astype(jnp.float32),                                # [lat, lat]
        diag_covinv.astype(jnp.float32),                            # [lat, 1]
    )

    def stream(rows):   # batch-streamed (double-buffered) lane-dense blocks
        return pl.BlockSpec((rows, tm), lambda i: (0, i))

    def resident(shape):  # constant index_map -> stays in VMEM across steps
        return pl.BlockSpec(shape, lambda i: (0, 0))

    in_specs = [
        stream(d), stream(lat),
        resident((hdim, d)), resident((hdim, 1)),
        resident((2 * lat, hdim)), resident((2 * lat, 1)),
        resident((hdim, lat)), resident((hdim, 1)),
        resident((d, hdim)), resident((d, 1)),
        resident((lat, lat)), resident((lat, 1)),
    ]
    out_specs = (
        stream(d), stream(lat), stream(lat),
        pl.BlockSpec((1, 1, 1), lambda i: (i, 0, 0)),   # per-tile scalar KL partial
    )
    out_shape = (
        jax.ShapeDtypeStruct((d, n_pad), bf),
        jax.ShapeDtypeStruct((lat, n_pad), bf),
        jax.ShapeDtypeStruct((lat, n_pad), bf),
        jax.ShapeDtypeStruct((grid_n, 1, 1), jnp.float32),
    )

    recon_t, mu_t, logvar_t, kl_parts = pl.pallas_call(
        functools.partial(gpvae_kernel, n_valid=n),
        out_shape=out_shape,
        grid=(grid_n,),
        in_specs=in_specs,
        out_specs=out_specs,
        compiler_params=pltpu.CompilerParams(
            # Independent batch tiles: shard across v7x's two TensorCores.
            dimension_semantics=("parallel",),
            # Explicit VMEM budget (v7x has only 64 MiB physical per TC);
            # actual per-step footprint is <1 MiB even at tm=2048.
            vmem_limit_bytes=32 * 1024 * 1024,
        ),
    )(*args)

    kl = jnp.sum(kl_parts) / n + 0.5 * (logdet - float(lat))
    # Transpose back to the caller's [N, feat] layout (outputs stay bf16).
    return recon_t[:, :n].T, mu_t[:, :n].T, logvar_t[:, :n].T, kl


# ----------------------------------------------------------------------------
# Deterministic parameter init (same shapes as the PyTorch module's __init__).
# ----------------------------------------------------------------------------
def init_params(key, input_dim, hidden_dim, latent_dim):
    def linear(k, fan_in, fan_out):
        kw, kb = jax.random.split(k)
        bound = 1.0 / math.sqrt(fan_in)
        w = jax.random.uniform(kw, (fan_in, fan_out), jnp.float32, -bound, bound)
        b = jax.random.uniform(kb, (fan_out,), jnp.float32, -bound, bound)
        return w, b

    k1, k2, k3, k4 = jax.random.split(key, 4)
    we1, be1 = linear(k1, input_dim, hidden_dim)
    we2, be2 = linear(k2, hidden_dim, 2 * latent_dim)
    wd1, bd1 = linear(k3, latent_dim, hidden_dim)
    wd2, bd2 = linear(k4, hidden_dim, input_dim)
    return dict(we1=we1, be1=be1, we2=we2, be2=be2,
                wd1=wd1, bd1=bd1, wd2=wd2, bd2=bd2)


# ----------------------------------------------------------------------------
# Pure-JAX reference with the same precision policy (bf16 matmul operands,
# f32 accumulation / elementwise) for the correctness check.
# ----------------------------------------------------------------------------
def reference(params, x, t, eps):
    bf = jnp.bfloat16
    lat = params["wd1"].shape[0]

    xb = x.astype(bf)
    epsf = eps.astype(bf).astype(jnp.float32)
    h = jnp.dot(xb, params["we1"].astype(bf), preferred_element_type=jnp.float32)
    h = jnp.maximum(h + params["be1"], 0.0).astype(bf)
    mu = jnp.dot(h, params["we2"][:, :lat].astype(bf),
                 preferred_element_type=jnp.float32) + params["be2"][:lat]
    logvar = jnp.dot(h, params["we2"][:, lat:].astype(bf),
                     preferred_element_type=jnp.float32) + params["be2"][lat:]
    std = jnp.exp(0.5 * logvar)
    z = mu + epsf * std
    hd = jnp.dot(z.astype(bf), params["wd1"].astype(bf),
                 preferred_element_type=jnp.float32)
    hd = jnp.maximum(hd + params["bd1"], 0.0).astype(bf)
    recon = jnp.dot(hd, params["wd2"].astype(bf),
                    preferred_element_type=jnp.float32) + params["bd2"]

    t_norm = (t - t.mean()) / jnp.std(t, ddof=1)
    diff = (t_norm[:, None] - t_norm[None, :]) / LENGTHSCALE
    cov = OUTPUTSCALE * jnp.exp(-0.5 * diff * diff)
    cov_inv = jnp.linalg.inv(cov)
    _, logdet = jnp.linalg.slogdet(cov)

    var_q = jnp.exp(logvar)
    kl = 0.5 * (
        jnp.sum(var_q * jnp.diagonal(cov_inv)[None, :], axis=1)
        + jnp.einsum("ni,ij,nj->n", mu, cov_inv, mu)
        - lat + logdet - jnp.sum(logvar, axis=1)
    )
    return recon, mu, logvar, kl.mean()


if __name__ == "__main__":
    # N > block_m so the batch grid (2 even tiles of 1024 lanes), the padded
    # last tile and the in-kernel KL mask are all exercised.
    N, INPUT_DIM, HIDDEN_DIM, LATENT_DIM = 2000, 16, 32, 8

    key = jax.random.PRNGKey(0)
    kp, kx, kt, ke = jax.random.split(key, 4)

    params = init_params(kp, INPUT_DIM, HIDDEN_DIM, LATENT_DIM)
    x = jax.random.normal(kx, (N, INPUT_DIM), jnp.float32)
    # GP "time" inputs, one per latent dimension (distinct, well-conditioned).
    t = jnp.arange(LATENT_DIM, dtype=jnp.float32) + 0.1 * jax.random.normal(
        kt, (LATENT_DIM,), jnp.float32
    )
    eps = jax.random.normal(ke, (N, LATENT_DIM), jnp.float32)

    recon, mu, logvar, kl_gp = jax.block_until_ready(
        gpvae_forward(params, x, t, eps)
    )

    r_recon, r_mu, r_logvar, r_kl = reference(params, x, t, eps)
    assert recon.shape == (N, INPUT_DIM)
    assert mu.shape == (N, LATENT_DIM) and logvar.shape == (N, LATENT_DIM)
    assert jnp.allclose(recon.astype(jnp.float32), r_recon, atol=2e-2, rtol=2e-2)
    assert jnp.allclose(mu.astype(jnp.float32), r_mu, atol=2e-2, rtol=2e-2)
    assert jnp.allclose(logvar.astype(jnp.float32), r_logvar, atol=2e-2, rtol=2e-2)
    assert jnp.allclose(kl_gp, r_kl, atol=2e-2, rtol=2e-2)
    assert bool(jnp.isfinite(kl_gp))

    print("KERNEL_OK")
</pallas_src>

<mosaic_0001>
module attributes {stable_mosaic.version = 11 : i64} {
  func.func @gpvae_kernel(%arg0: i32, %arg1: memref<16x1024xbf16, #tpu.memory_space<vmem>>, %arg2: memref<8x1024xbf16, #tpu.memory_space<vmem>>, %arg3: memref<32x16xbf16, #tpu.memory_space<vmem>>, %arg4: memref<32x1xf32, #tpu.memory_space<vmem>>, %arg5: memref<16x32xbf16, #tpu.memory_space<vmem>>, %arg6: memref<16x1xf32, #tpu.memory_space<vmem>>, %arg7: memref<32x8xbf16, #tpu.memory_space<vmem>>, %arg8: memref<32x1xf32, #tpu.memory_space<vmem>>, %arg9: memref<16x32xbf16, #tpu.memory_space<vmem>>, %arg10: memref<16x1xf32, #tpu.memory_space<vmem>>, %arg11: memref<8x8xf32, #tpu.memory_space<vmem>>, %arg12: memref<8x1xf32, #tpu.memory_space<vmem>>, %arg13: memref<16x1024xbf16, #tpu.memory_space<vmem>>, %arg14: memref<8x1024xbf16, #tpu.memory_space<vmem>>, %arg15: memref<8x1024xbf16, #tpu.memory_space<vmem>>, %arg16: memref<1x1x1xf32, #tpu.memory_space<vmem>>) attributes {dimension_semantics = [#tpu.dimension_semantics<parallel>], iteration_bounds = array<i64: 2>, scalar_prefetch = 0 : i64, scratch_operands = 0 : i64, tpu.core_type = #tpu.core_type<tc>, window_params = [{transform_indices = @transform_0, window_bounds = array<i64: 16, 1024>}, {transform_indices = @transform_1, window_bounds = array<i64: 8, 1024>}, {pipeline_mode = #tpu.pipeline_mode<synchronous>, transform_indices = @transform_2, window_bounds = array<i64: 32, 16>}, {pipeline_mode = #tpu.pipeline_mode<synchronous>, transform_indices = @transform_3, window_bounds = array<i64: 32, 1>}, {pipeline_mode = #tpu.pipeline_mode<synchronous>, transform_indices = @transform_4, window_bounds = array<i64: 16, 32>}, {pipeline_mode = #tpu.pipeline_mode<synchronous>, transform_indices = @transform_5, window_bounds = array<i64: 16, 1>}, {pipeline_mode = #tpu.pipeline_mode<synchronous>, transform_indices = @transform_6, window_bounds = array<i64: 32, 8>}, {pipeline_mode = #tpu.pipeline_mode<synchronous>, transform_indices = @transform_7, window_bounds = array<i64: 32, 1>}, {pipeline_mode = #tpu.pipeline_mode<synchronous>, transform_indices = @transform_8, window_bounds = array<i64: 16, 32>}, {pipeline_mode = #tpu.pipeline_mode<synchronous>, transform_indices = @transform_9, window_bounds = array<i64: 16, 1>}, {pipeline_mode = #tpu.pipeline_mode<synchronous>, transform_indices = @transform_10, window_bounds = array<i64: 8, 8>}, {pipeline_mode = #tpu.pipeline_mode<synchronous>, transform_indices = @transform_11, window_bounds = array<i64: 8, 1>}, {transform_indices = @transform_12, window_bounds = array<i64: 16, 1024>}, {transform_indices = @transform_13, window_bounds = array<i64: 8, 1024>}, {transform_indices = @transform_14, window_bounds = array<i64: 8, 1024>}, {transform_indices = @transform_15, window_bounds = array<i64: 1, 1, 1>}]} {
    %c0 = arith.constant 0 : index
    %c0_0 = arith.constant 0 : index
    %0 = vector.load %arg3[%c0, %c0_0] : memref<32x16xbf16, #tpu.memory_space<vmem>>, vector<32x16xbf16>
    %c0_1 = arith.constant 0 : index
    %c0_2 = arith.constant 0 : index
    %1 = vector.load %arg1[%c0_1, %c0_2] : memref<16x1024xbf16, #tpu.memory_space<vmem>>, vector<16x1024xbf16>
    %cst = arith.constant dense<0.000000e+00> : vector<32x1024xf32>
    %2 = tpu.matmul %0, %1, %cst {dimension_numbers = #tpu.dot_dimension_numbers<[1], [0], [0], [1], [0, 0, 1, 1], [], []>} : vector<32x16xbf16>, vector<16x1024xbf16>, vector<32x1024xf32> -> vector<32x1024xf32>
    %c0_3 = arith.constant 0 : index
    %c0_4 = arith.constant 0 : index
    %3 = vector.load %arg4[%c0_3, %c0_4] : memref<32x1xf32, #tpu.memory_space<vmem>>, vector<32x1xf32>
    %4 = vector.broadcast %3 : vector<32x1xf32> to vector<32x1024xf32>
    %5 = arith.addf %2, %4 : vector<32x1024xf32>
    %cst_5 = arith.constant 0.000000e+00 : f32
    %6 = vector.broadcast %cst_5 : f32 to vector<32x1024xf32>
    %7 = arith.maximumf %5, %6 : vector<32x1024xf32>
    %8 = arith.truncf %7 : vector<32x1024xf32> to vector<32x1024xbf16>
    %c0_6 = arith.constant 0 : index
    %c0_7 = arith.constant 0 : index
    %9 = vector.load %arg5[%c0_6, %c0_7] : memref<16x32xbf16, #tpu.memory_space<vmem>>, vector<16x32xbf16>
    %cst_8 = arith.constant dense<0.000000e+00> : vector<16x1024xf32>
    %10 = tpu.matmul %9, %8, %cst_8 {dimension_numbers = #tpu.dot_dimension_numbers<[1], [0], [0], [1], [0, 0, 1, 1], [], []>} : vector<16x32xbf16>, vector<32x1024xbf16>, vector<16x1024xf32> -> vector<16x1024xf32>
    %c0_9 = arith.constant 0 : index
    %c0_10 = arith.constant 0 : index
    %11 = vector.load %arg6[%c0_9, %c0_10] : memref<16x1xf32, #tpu.memory_space<vmem>>, vector<16x1xf32>
    %12 = vector.broadcast %11 : vector<16x1xf32> to vector<16x1024xf32>
    %13 = arith.addf %10, %12 : vector<16x1024xf32>
    %14 = vector.extract_strided_slice %13 {offsets = [0, 0], sizes = [8, 1024], strides = [1, 1]} : vector<16x1024xf32> to vector<8x1024xf32>
    %15 = vector.extract_strided_slice %13 {offsets = [8, 0], sizes = [8, 1024], strides = [1, 1]} : vector<16x1024xf32> to vector<8x1024xf32>
    %cst_11 = arith.constant 5.000000e-01 : f32
    %16 = vector.broadcast %cst_11 : f32 to vector<8x1024xf32>
    %17 = arith.mulf %16, %15 : vector<8x1024xf32>
    %18 = math.exp %17 : vector<8x1024xf32>
    %c0_12 = arith.constant 0 : index
    %c0_13 = arith.constant 0 : index
    %19 = vector.load %arg2[%c0_12, %c0_13] : memref<8x1024xbf16, #tpu.memory_space<vmem>>, vector<8x1024xbf16>
    %20 = arith.extf %19 : vector<8x1024xbf16> to vector<8x1024xf32>
    %21 = arith.mulf %20, %18 : vector<8x1024xf32>
    %22 = arith.addf %14, %21 : vector<8x1024xf32>
    %c0_14 = arith.constant 0 : index
    %c0_15 = arith.constant 0 : index
    %23 = vector.load %arg7[%c0_14, %c0_15] : memref<32x8xbf16, #tpu.memory_space<vmem>>, vector<32x8xbf16>
    %24 = arith.truncf %22 : vector<8x1024xf32> to vector<8x1024xbf16>
    %cst_16 = arith.constant dense<0.000000e+00> : vector<32x1024xf32>
    %25 = tpu.matmul %23, %24, %cst_16 {dimension_numbers = #tpu.dot_dimension_numbers<[1], [0], [0], [1], [0, 0, 1, 1], [], []>} : vector<32x8xbf16>, vector<8x1024xbf16>, vector<32x1024xf32> -> vector<32x1024xf32>
    %c0_17 = arith.constant 0 : index
    %c0_18 = arith.constant 0 : index
    %26 = vector.load %arg8[%c0_17, %c0_18] : memref<32x1xf32, #tpu.memory_space<vmem>>, vector<32x1xf32>
    %27 = vector.broadcast %26 : vector<32x1xf32> to vector<32x1024xf32>
    %28 = arith.addf %25, %27 : vector<32x1024xf32>
    %cst_19 = arith.constant 0.000000e+00 : f32
    %29 = vector.broadcast %cst_19 : f32 to vector<32x1024xf32>
    %30 = arith.maximumf %28, %29 : vector<32x1024xf32>
    %31 = arith.truncf %30 : vector<32x1024xf32> to vector<32x1024xbf16>
    %c0_20 = arith.constant 0 : index
    %c0_21 = arith.constant 0 : index
    %32 = vector.load %arg9[%c0_20, %c0_21] : memref<16x32xbf16, #tpu.memory_space<vmem>>, vector<16x32xbf16>
    %cst_22 = arith.constant dense<0.000000e+00> : vector<16x1024xf32>
    %33 = tpu.matmul %32, %31, %cst_22 {dimension_numbers = #tpu.dot_dimension_numbers<[1], [0], [0], [1], [0, 0, 1, 1], [], []>} : vector<16x32xbf16>, vector<32x1024xbf16>, vector<16x1024xf32> -> vector<16x1024xf32>
    %c0_23 = arith.constant 0 : index
    %c0_24 = arith.constant 0 : index
    %34 = vector.load %arg10[%c0_23, %c0_24] : memref<16x1xf32, #tpu.memory_space<vmem>>, vector<16x1xf32>
    %35 = vector.broadcast %34 : vector<16x1xf32> to vector<16x1024xf32>
    %36 = arith.addf %33, %35 : vector<16x1024xf32>
    %37 = arith.truncf %36 : vector<16x1024xf32> to vector<16x1024xbf16>
    %c0_25 = arith.constant 0 : index
    %c0_26 = arith.constant 0 : index
    %38 = vector.load %arg13[%c0_25, %c0_26] : memref<16x1024xbf16, #tpu.memory_space<vmem>>, vector<16x1024xbf16>
    tpu.vector_store %arg13[%c0_25, %c0_26], %37 {strides = array<i32>} : memref<16x1024xbf16, #tpu.memory_space<vmem>>, vector<16x1024xbf16>,
    %39 = arith.truncf %14 : vector<8x1024xf32> to vector<8x1024xbf16>
    %c0_27 = arith.constant 0 : index
    %c0_28 = arith.constant 0 : index
    %40 = vector.load %arg14[%c0_27, %c0_28] : memref<8x1024xbf16, #tpu.memory_space<vmem>>, vector<8x1024xbf16>
    tpu.vector_store %arg14[%c0_27, %c0_28], %39 {strides = array<i32>} : memref<8x1024xbf16, #tpu.memory_space<vmem>>, vector<8x1024xbf16>,
    %41 = arith.truncf %15 : vector<8x1024xf32> to vector<8x1024xbf16>
    %c0_29 = arith.constant 0 : index
    %c0_30 = arith.constant 0 : index
    %42 = vector.load %arg15[%c0_29, %c0_30] : memref<8x1024xbf16, #tpu.memory_space<vmem>>, vector<8x1024xbf16>
    tpu.vector_store %arg15[%c0_29, %c0_30], %41 {strides = array<i32>} : memref<8x1024xbf16, #tpu.memory_space<vmem>>, vector<8x1024xbf16>,
    %43 = arith.mulf %18, %18 : vector<8x1024xf32>
    %c0_31 = arith.constant 0 : index
    %c0_32 = arith.constant 0 : index
    %44 = vector.load %arg12[%c0_31, %c0_32] : memref<8x1xf32, #tpu.memory_space<vmem>>, vector<8x1xf32>
    %45 = vector.broadcast %44 : vector<8x1xf32> to vector<8x1024xf32>
    %46 = arith.mulf %43, %45 : vector<8x1024xf32>
    %cst_33 = arith.constant dense<0.000000e+00> : vector<1024xf32>
    %47 = vector.multi_reduction <add>, %46, %cst_33 [0] : vector<8x1024xf32> to vector<1024xf32>
    %48 = vector.shape_cast %47 : vector<1024xf32> to vector<1x1024xf32>
    %c0_34 = arith.constant 0 : index
    %c0_35 = arith.constant 0 : index
    %49 = vector.load %arg11[%c0_34, %c0_35] : memref<8x8xf32, #tpu.memory_space<vmem>>, vector<8x8xf32>
    %cst_36 = arith.constant dense<0.000000e+00> : vector<8x1024xf32>
    %50 = tpu.matmul %49, %14, %cst_36 {dimension_numbers = #tpu.dot_dimension_numbers<[1], [0], [0], [1], [0, 0, 1, 1], [], []>} : vector<8x8xf32>, vector<8x1024xf32>, vector<8x1024xf32> -> vector<8x1024xf32>
    %51 = arith.mulf %50, %14 : vector<8x1024xf32>
    %cst_37 = arith.constant dense<0.000000e+00> : vector<1024xf32>
    %52 = vector.multi_reduction <add>, %51, %cst_37 [0] : vector<8x1024xf32> to vector<1024xf32>
    %53 = vector.shape_cast %52 : vector<1024xf32> to vector<1x1024xf32>
    %cst_38 = arith.constant dense<0.000000e+00> : vector<1024xf32>
    %54 = vector.multi_reduction <add>, %15, %cst_38 [0] : vector<8x1024xf32> to vector<1024xf32>
    %55 = vector.shape_cast %54 : vector<1024xf32> to vector<1x1024xf32>
    %56 = arith.addf %48, %53 : vector<1x1024xf32>
    %57 = arith.subf %56, %55 : vector<1x1024xf32>
    %cst_39 = arith.constant 5.000000e-01 : f32
    %58 = vector.broadcast %cst_39 : f32 to vector<1x1024xf32>
    %59 = arith.mulf %58, %57 : vector<1x1024xf32>
    %c1024_i32 = arith.constant 1024 : i32
    %60 = arith.muli %arg0, %c1024_i32 : i32
    %61 = tpu.iota {dimensions = array<i32: 1>} : vector<1x1024xi32>
    %62 = vector.broadcast %60 : i32 to vector<1x1024xi32>
    %63 = arith.addi %62, %61 : vector<1x1024xi32>
    %c2000_i32 = arith.constant 2000 : i32
    %64 = vector.broadcast %c2000_i32 : i32 to vector<1x1024xi32>
    %65 = arith.cmpi slt, %63, %64 : vector<1x1024xi32>
    %cst_40 = arith.constant 0.000000e+00 : f32
    %66 = vector.broadcast %cst_40 : f32 to vector<1x1024xf32>
    %67 = arith.select %65, %59, %66 : vector<1x1024xi1>, vector<1x1024xf32>
    %cst_41 = arith.constant dense<0.000000e+00> : vector<1xf32>
    %68 = vector.multi_reduction <add>, %67, %cst_41 [1] : vector<1x1024xf32> to vector<1xf32>
    %69 = vector.shape_cast %68 : vector<1xf32> to vector<1x1xf32>
    %c0_42 = arith.constant 0 : index
    %c0_43 = arith.constant 0 : index
    %c0_44 = arith.constant 0 : index
    %70 = vector.load %arg16[%c0_42, %c0_43, %c0_44] : memref<1x1x1xf32, #tpu.memory_space<vmem>>, vector<1x1x1xf32>
    %71 = vector.shape_cast %70 : vector<1x1x1xf32> to vector<1x1xf32>
    %72 = vector.shape_cast %69 : vector<1x1xf32> to vector<1x1x1xf32>
    tpu.vector_store %arg16[%c0_42, %c0_43, %c0_44], %72 {strides = array<i32>} : memref<1x1x1xf32, #tpu.memory_space<vmem>>, vector<1x1x1xf32>,
    return
  }
  func.func @transform_0(%arg0: i32) -> (i32, i32) {
    %c0_i32 = arith.constant 0 : i32
    %c0_i32_0 = arith.constant 0 : i32
    return %c0_i32, %arg0 : i32, i32
  }
  func.func @transform_1(%arg0: i32) -> (i32, i32) {
    %c0_i32 = arith.constant 0 : i32
    %c0_i32_0 = arith.constant 0 : i32
    return %c0_i32, %arg0 : i32, i32
  }
  func.func @transform_2(%arg0: i32) -> (i32, i32) {
    %c0_i32 = arith.constant 0 : i32
    %c0_i32_0 = arith.constant 0 : i32
    %c0_i32_1 = arith.constant 0 : i32
    return %c0_i32, %c0_i32_0 : i32, i32
  }
  func.func @transform_3(%arg0: i32) -> (i32, i32) {
    %c0_i32 = arith.constant 0 : i32
    %c0_i32_0 = arith.constant 0 : i32
    %c0_i32_1 = arith.constant 0 : i32
    return %c0_i32, %c0_i32_0 : i32, i32
  }
  func.func @transform_4(%arg0: i32) -> (i32, i32) {
    %c0_i32 = arith.constant 0 : i32
    %c0_i32_0 = arith.constant 0 : i32
    %c0_i32_1 = arith.constant 0 : i32
    return %c0_i32, %c0_i32_0 : i32, i32
  }
  func.func @transform_5(%arg0: i32) -> (i32, i32) {
    %c0_i32 = arith.constant 0 : i32
    %c0_i32_0 = arith.constant 0 : i32
    %c0_i32_1 = arith.constant 0 : i32
    return %c0_i32, %c0_i32_0 : i32, i32
  }
  func.func @transform_6(%arg0: i32) -> (i32, i32) {
    %c0_i32 = arith.constant 0 : i32
    %c0_i32_0 = arith.constant 0 : i32
    %c0_i32_1 = arith.constant 0 : i32
    return %c0_i32, %c0_i32_0 : i32, i32
  }
  func.func @transform_7(%arg0: i32) -> (i32, i32) {
    %c0_i32 = arith.constant 0 : i32
    %c0_i32_0 = arith.constant 0 : i32
    %c0_i32_1 = arith.constant 0 : i32
    return %c0_i32, %c0_i32_0 : i32, i32
  }
  func.func @transform_8(%arg0: i32) -> (i32, i32) {
    %c0_i32 = arith.constant 0 : i32
    %c0_i32_0 = arith.constant 0 : i32
    %c0_i32_1 = arith.constant 0 : i32
    return %c0_i32, %c0_i32_0 : i32, i32
  }
  func.func @transform_9(%arg0: i32) -> (i32, i32) {
    %c0_i32 = arith.constant 0 : i32
    %c0_i32_0 = arith.constant 0 : i32
    %c0_i32_1 = arith.constant 0 : i32
    return %c0_i32, %c0_i32_0 : i32, i32
  }
  func.func @transform_10(%arg0: i32) -> (i32, i32) {
    %c0_i32 = arith.constant 0 : i32
    %c0_i32_0 = arith.constant 0 : i32
    %c0_i32_1 = arith.constant 0 : i32
    return %c0_i32, %c0_i32_0 : i32, i32
  }
  func.func @transform_11(%arg0: i32) -> (i32, i32) {
    %c0_i32 = arith.constant 0 : i32
    %c0_i32_0 = arith.constant 0 : i32
    %c0_i32_1 = arith.constant 0 : i32
    return %c0_i32, %c0_i32_0 : i32, i32
  }
  func.func @transform_12(%arg0: i32) -> (i32, i32) {
    %c0_i32 = arith.constant 0 : i32
    %c0_i32_0 = arith.constant 0 : i32
    return %c0_i32, %arg0 : i32, i32
  }
  func.func @transform_13(%arg0: i32) -> (i32, i32) {
    %c0_i32 = arith.constant 0 : i32
    %c0_i32_0 = arith.constant 0 : i32
    return %c0_i32, %arg0 : i32, i32
  }
  func.func @transform_14(%arg0: i32) -> (i32, i32) {
    %c0_i32 = arith.constant 0 : i32
    %c0_i32_0 = arith.constant 0 : i32
    return %c0_i32, %arg0 : i32, i32
  }
  func.func @transform_15(%arg0: i32) -> (i32, i32, i32) {
    %c0_i32 = arith.constant 0 : i32
    %c0_i32_0 = arith.constant 0 : i32
    %c0_i32_1 = arith.constant 0 : i32
    return %arg0, %c0_i32, %c0_i32_0 : i32, i32, i32
  }
}

</mosaic_0001>

<llo_original>
// kernel: tpu_custom_call.1
$region0: #{tpu_custom_call.1}
  #allocation0 [shape = 'u32[]', space=smem, size = 0x4, offset = 0x4, fixed_abs, tag = 'smem constant byte address 0x4 - core index']
  #allocation1 [shape = 'u32[144,128]{1,0:T(1,128)}', space=vmem, size = 0x12000, scoped, tag = 'internal scratch']
  %s0 = inlined_call_operand.vmem [shape: bf16[16,2048], index: 0, kind: input, shape index: {}]
  %s1 = inlined_call_operand.hbm [shape: bf16[8,2048], index: 1, kind: input, shape index: {}]
  %s2 = inlined_call_operand.vmem [shape: bf16[32,16], index: 2, kind: input, shape index: {}]
  %s3 = inlined_call_operand.vmem [shape: f32[32,1], index: 3, kind: input, shape index: {}]
  %s4 = inlined_call_operand.vmem [shape: bf16[16,32], index: 4, kind: input, shape index: {}]
  %s5 = inlined_call_operand.vmem [shape: f32[16,1], index: 5, kind: input, shape index: {}]
  %s6 = inlined_call_operand.vmem [shape: bf16[32,8], index: 6, kind: input, shape index: {}]
  %s7 = inlined_call_operand.vmem [shape: f32[32,1], index: 7, kind: input, shape index: {}]
  %s8 = inlined_call_operand.vmem [shape: bf16[16,32], index: 8, kind: input, shape index: {}]
  %s9 = inlined_call_operand.vmem [shape: f32[16,1], index: 9, kind: input, shape index: {}]
  %s10 = inlined_call_operand.vmem [shape: f32[8,8], index: 10, kind: input, shape index: {}]
  %s11 = inlined_call_operand.vmem [shape: f32[8,1], index: 11, kind: input, shape index: {}]
  %s12 = inlined_call_operand.hbm [shape: bf16[16,2048], index: 12, kind: output, shape index: {0}]
  %s13 = inlined_call_operand.hbm [shape: bf16[8,2048], index: 13, kind: output, shape index: {1}]
  %s14 = inlined_call_operand.hbm [shape: bf16[8,2048], index: 14, kind: output, shape index: {2}]
  %s15 = inlined_call_operand.vmem [shape: f32[2,1,1], index: 15, kind: output, shape index: {3}]
  %16 = xla_tuple %s12, %s13, %s14, %s15
  %s17 = sld [smem:[#allocation0]]
  $region132: #{tpu_custom_call.1} parent=0
    _
  %s19 = ssub.s32 1, %s17
  %s20 = scalar_select 0, %s19, %s17
  $region1: #{tpu_custom_call.1} parent=0
    #allocation2 [shape = 'u8[65536]{0}', space=vmem, size = 0x10000, scoped, tag = 'input window, operand 0']
    #allocation3 [shape = 'u8[32768]{0}', space=vmem, size = 0x8000, scoped, tag = 'input window, operand 1']
    #allocation4 [shape = 's32[2]{0}', space=sflag, size = 0x8, scoped, tag = 'scoped memory for tpu_custom_call.1']
    #allocation5 [shape = 's32[2]{0}', space=sflag, size = 0x8, scoped, tag = 'scoped memory for tpu_custom_call.1']
    #allocation6 [shape = 'u8[65536]{0}', space=vmem, size = 0x10000, scoped, tag = 'output window, operand 0']
    #allocation7 [shape = 'u8[32768]{0}', space=vmem, size = 0x8000, scoped, tag = 'output window, operand 1']
    #allocation8 [shape = 's32[2]{0}', space=sflag, size = 0x8, scoped, tag = 'scoped memory for tpu_custom_call.1']
    #allocation9 [shape = 'u8[32768]{0}', space=vmem, size = 0x8000, scoped, tag = 'output window, operand 2']
    %21 = vsyncpa [#allocation4], 0
    %s22 = scalar_lea.sflag [#allocation4], 1
    %23 = vsyncpa %s22, 0
    %24 = vsyncpa [#allocation5], 0
    %s25 = scalar_lea.sflag [#allocation5], 1
    %26 = vsyncpa %s25, 0
    %27 = vsyncpa [#allocation8], 0
    %s28 = scalar_lea.sflag [#allocation8], 1
    %29 = vsyncpa %s28, 0
    loop: start=0, step=1, limit=4
    $region2: #{tpu_custom_call.1} parent=1 // loop_pre_header
      _
    $region3: #{tpu_custom_call.1} parent=1 // loop_header
      %s31 = sphi 0, %s35
      %p32 = scmp.ge.s32.totalorder %s31, 4
      %s41 = sphi 0, %s43
      %s44 = sphi 0, %s41
      %s45 = sphi 0, %s44
      %s61 = sphi 0, %s45
      %s67 = sphi 0, %s69
      %s70 = sphi 0, %s67
      %s71 = sphi 0, %s70
      %s87 = sphi 0, %s71
      %s91 = sphi 0, %s91
      %s93 = sphi 0, %s91
      %s94 = sphi 0, %s93
      %s108 = sphi 0, %s94
      %s112 = sphi 0, %s112
      %s114 = sphi 0, %s112
      %s115 = sphi 0, %s114
      %s129 = sphi 0, %s115
      %s133 = sphi 0, %s133
      %s135 = sphi 0, %s133
      %s136 = sphi 0, %s135
      %s150 = sphi 0, %s136
      %s154 = sphi 0, %s154
      %s156 = sphi 0, %s154
      %s157 = sphi 0, %s156
      %s171 = sphi 0, %s157
      %s175 = sphi 0, %s175
      %s177 = sphi 0, %s175
      %s178 = sphi 0, %s177
      %s192 = sphi 0, %s178
      %s196 = sphi 0, %s196
      %s198 = sphi 0, %s196
      %s199 = sphi 0, %s198
      %s213 = sphi 0, %s199
      %s217 = sphi 0, %s217
      %s219 = sphi 0, %s217
      %s220 = sphi 0, %s219
      %s234 = sphi 0, %s220
      %s238 = sphi 0, %s238
      %s240 = sphi 0, %s238
      %s241 = sphi 0, %s240
      %s255 = sphi 0, %s241
      %s259 = sphi 0, %s259
      %s261 = sphi 0, %s259
      %s262 = sphi 0, %s261
      %s276 = sphi 0, %s262
      %s280 = sphi 0, %s280
      %s282 = sphi 0, %s280
      %s283 = sphi 0, %s282
      %s297 = sphi 0, %s283
      %s303 = sphi 0, %s305
      %s306 = sphi 0, %s303
      %s307 = sphi 0, %s306
      %s323 = sphi 0, %s307
      %s329 = sphi 0, %s331
      %s332 = sphi 0, %s329
      %s333 = sphi 0, %s332
      %s349 = sphi 0, %s333
      %s355 = sphi 0, %s357
      %s358 = sphi 0, %s355
      %s359 = sphi 0, %s358
      %s375 = sphi 0, %s359
      %s381 = sphi 0, %s383
      %s384 = sphi 0, %s381
      %s385 = sphi 0, %s384
      %s401 = sphi 0, %s385
    $region4: #{tpu_custom_call.1} parent=1 // loop_header_branch
      %34 = sbr.rel (%p32) target = $region8
    $region5: #{tpu_custom_call.1} parent=1 // loop_body
      %s36 = ssub.s32 %s31, 1
      %s37 = ssub.s32 %s31, 2
      %s38 = sadd.s32 %s31, 1
      %s39 = ssub.s32 %s31, %s38
      %p40 = scmp.eq.s32.totalorder %s39, 0
      %s42 = sadd.s32 %s41, 1
      %s43 = scalar_select %p40, %s41, %s42
      %p46 = pneg %p40
      %p47 = scmp.eq.s32.totalorder %s31, 1
      %p48 = por %p46, %p47
      %p49 = scmp.ne.s32.totalorder %s41, %s44
      %p50 = scmp.eq.s32.totalorder %s31, 0
      %p51 = por %p49, %p50
      %p52 = scmp.ne.s32.totalorder %s41, %s44
      %p53 = scmp.eq.s32.totalorder %s36, 1
      %p54 = por %p52, %p53
      %p55 = scmp.ne.s32.totalorder %s44, %s45
      %p56 = scmp.eq.s32.totalorder %s36, 0
      %p57 = por %p55, %p56
      %p58 = scmp.ne.s32.totalorder %s44, %s45
      %p59 = scmp.eq.s32.totalorder %s37, 1
      %p60 = por %p58, %p59
      %p62 = scmp.ne.s32.totalorder %s45, %s61
      %p63 = scmp.eq.s32.totalorder %s37, 0
      %p64 = por %p62, %p63
      %s65 = ssub.s32 %s31, %s38
      %p66 = scmp.eq.s32.totalorder %s65, 0
      %s68 = sadd.s32 %s67, 1
      %s69 = scalar_select %p66, %s67, %s68
      %p72 = pneg %p66
      %p73 = scmp.eq.s32.totalorder %s31, 1
      %p74 = por %p72, %p73
      %p75 = scmp.ne.s32.totalorder %s67, %s70
      %p76 = scmp.eq.s32.totalorder %s31, 0
      %p77 = por %p75, %p76
      %p78 = scmp.ne.s32.totalorder %s67, %s70
      %p79 = scmp.eq.s32.totalorder %s36, 1
      %p80 = por %p78, %p79
      %p81 = scmp.ne.s32.totalorder %s70, %s71
      %p82 = scmp.eq.s32.totalorder %s36, 0
      %p83 = por %p81, %p82
      %p84 = scmp.ne.s32.totalorder %s70, %s71
      %p85 = scmp.eq.s32.totalorder %s37, 1
      %p86 = por %p84, %p85
      %p88 = scmp.ne.s32.totalorder %s71, %s87
      %p89 = scmp.eq.s32.totalorder %s37, 0
      %p90 = por %p88, %p89
      %s92 = sadd.s32 %s91, 1
      %p95 = scmp.eq.s32.totalorder %s31, 1
      %p96 = scmp.ne.s32.totalorder %s91, %s93
      %p97 = scmp.eq.s32.totalorder %s31, 0
      %p98 = por %p96, %p97
      %p99 = scmp.ne.s32.totalorder %s91, %s93
      %p100 = scmp.eq.s32.totalorder %s36, 1
      %p101 = por %p99, %p100
      %p102 = scmp.ne.s32.totalorder %s93, %s94
      %p103 = scmp.eq.s32.totalorder %s36, 0
      %p104 = por %p102, %p103
      %p105 = scmp.ne.s32.totalorder %s93, %s94
      %p106 = scmp.eq.s32.totalorder %s37, 1
      %p107 = por %p105, %p106
      %p109 = scmp.ne.s32.totalorder %s94, %s108
      %p110 = scmp.eq.s32.totalorder %s37, 0
      %p111 = por %p109, %p110
      %s113 = sadd.s32 %s112, 1
      %p116 = scmp.eq.s32.totalorder %s31, 1
      %p117 = scmp.ne.s32.totalorder %s112, %s114
      %p118 = scmp.eq.s32.totalorder %s31, 0
      %p119 = por %p117, %p118
      %p120 = scmp.ne.s32.totalorder %s112, %s114
      %p121 = scmp.eq.s32.totalorder %s36, 1
      %p122 = por %p120, %p121
      %p123 = scmp.ne.s32.totalorder %s114, %s115
      %p124 = scmp.eq.s32.totalorder %s36, 0
      %p125 = por %p123, %p124
      %p126 = scmp.ne.s32.totalorder %s114, %s115
      %p127 = scmp.eq.s32.totalorder %s37, 1
      %p128 = por %p126, %p127
      %p130 = scmp.ne.s32.totalorder %s115, %s129
      %p131 = scmp.eq.s32.totalorder %s37, 0
      %p132 = por %p130, %p131
      %s134 = sadd.s32 %s133, 1
      %p137 = scmp.eq.s32.totalorder %s31, 1
      %p138 = scmp.ne.s32.totalorder %s133, %s135
      %p139 = scmp.eq.s32.totalorder %s31, 0
      %p140 = por %p138, %p139
      %p141 = scmp.ne.s32.totalorder %s133, %s135
      %p142 = scmp.eq.s32.totalorder %s36, 1
      %p143 = por %p141, %p142
      %p144 = scmp.ne.s32.totalorder %s135, %s136
      %p145 = scmp.eq.s32.totalorder %s36, 0
      %p146 = por %p144, %p145
      %p147 = scmp.ne.s32.totalorder %s135, %s136
      %p148 = scmp.eq.s32.totalorder %s37, 1
      %p149 = por %p147, %p148
      %p151 = scmp.ne.s32.totalorder %s136, %s150
      %p152 = scmp.eq.s32.totalorder %s37, 0
      %p153 = por %p151, %p152
      %s155 = sadd.s32 %s154, 1
      %p158 = scmp.eq.s32.totalorder %s31, 1
      %p159 = scmp.ne.s32.totalorder %s154, %s156
      %p160 = scmp.eq.s32.totalorder %s31, 0
      %p161 = por %p159, %p160
      %p162 = scmp.ne.s32.totalorder %s154, %s156
      %p163 = scmp.eq.s32.totalorder %s36, 1
      %p164 = por %p162, %p163
      %p165 = scmp.ne.s32.totalorder %s156, %s157
      %p166 = scmp.eq.s32.totalorder %s36, 0
      %p167 = por %p165, %p166
      %p168 = scmp.ne.s32.totalorder %s156, %s157
      %p169 = scmp.eq.s32.totalorder %s37, 1
      %p170 = por %p168, %p169
      %p172 = scmp.ne.s32.totalorder %s157, %s171
      %p173 = scmp.eq.s32.totalorder %s37, 0
      %p174 = por %p172, %p173
      %s176 = sadd.s32 %s175, 1
      %p179 = scmp.eq.s32.totalorder %s31, 1
      %p180 = scmp.ne.s32.totalorder %s175, %s177
      %p181 = scmp.eq.s32.totalorder %s31, 0
      %p182 = por %p180, %p181
      %p183 = scmp.ne.s32.totalorder %s175, %s177
      %p184 = scmp.eq.s32.totalorder %s36, 1
      %p185 = por %p183, %p184
      %p186 = scmp.ne.s32.totalorder %s177, %s178
      %p187 = scmp.eq.s32.totalorder %s36, 0
      %p188 = por %p186, %p187
      %p189 = scmp.ne.s32.totalorder %s177, %s178
      %p190 = scmp.eq.s32.totalorder %s37, 1
      %p191 = por %p189, %p190
      %p193 = scmp.ne.s32.totalorder %s178, %s192
      %p194 = scmp.eq.s32.totalorder %s37, 0
      %p195 = por %p193, %p194
      %s197 = sadd.s32 %s196, 1
      %p200 = scmp.eq.s32.totalorder %s31, 1
      %p201 = scmp.ne.s32.totalorder %s196, %s198
      %p202 = scmp.eq.s32.totalorder %s31, 0
      %p203 = por %p201, %p202
      %p204 = scmp.ne.s32.totalorder %s196, %s198
      %p205 = scmp.eq.s32.totalorder %s36, 1
      %p206 = por %p204, %p205
      %p207 = scmp.ne.s32.totalorder %s198, %s199
      %p208 = scmp.eq.s32.totalorder %s36, 0
      %p209 = por %p207, %p208
      %p210 = scmp.ne.s32.totalorder %s198, %s199
      %p211 = scmp.eq.s32.totalorder %s37, 1
      %p212 = por %p210, %p211
      %p214 = scmp.ne.s32.totalorder %s199, %s213
      %p215 = scmp.eq.s32.totalorder %s37, 0
      %p216 = por %p214, %p215
      %s218 = sadd.s32 %s217, 1
      %p221 = scmp.eq.s32.totalorder %s31, 1
      %p222 = scmp.ne.s32.totalorder %s217, %s219
      %p223 = scmp.eq.s32.totalorder %s31, 0
      %p224 = por %p222, %p223
      %p225 = scmp.ne.s32.totalorder %s217, %s219
      %p226 = scmp.eq.s32.totalorder %s36, 1
      %p227 = por %p225, %p226
      %p228 = scmp.ne.s32.totalorder %s219, %s220
      %p229 = scmp.eq.s32.totalorder %s36, 0
      %p230 = por %p228, %p229
      %p231 = scmp.ne.s32.totalorder %s219, %s220
      %p232 = scmp.eq.s32.totalorder %s37, 1
      %p233 = por %p231, %p232
      %p235 = scmp.ne.s32.totalorder %s220, %s234
      %p236 = scmp.eq.s32.totalorder %s37, 0
      %p237 = por %p235, %p236
      %s239 = sadd.s32 %s238, 1
      %p242 = scmp.eq.s32.totalorder %s31, 1
      %p243 = scmp.ne.s32.totalorder %s238, %s240
      %p244 = scmp.eq.s32.totalorder %s31, 0
      %p245 = por %p243, %p244
      %p246 = scmp.ne.s32.totalorder %s238, %s240
      %p247 = scmp.eq.s32.totalorder %s36, 1
      %p248 = por %p246, %p247
      %p249 = scmp.ne.s32.totalorder %s240, %s241
      %p250 = scmp.eq.s32.totalorder %s36, 0
      %p251 = por %p249, %p250
      %p252 = scmp.ne.s32.totalorder %s240, %s241
      %p253 = scmp.eq.s32.totalorder %s37, 1
      %p254 = por %p252, %p253
      %p256 = scmp.ne.s32.totalorder %s241, %s255
      %p257 = scmp.eq.s32.totalorder %s37, 0
      %p258 = por %p256, %p257
      %s260 = sadd.s32 %s259, 1
      %p263 = scmp.eq.s32.totalorder %s31, 1
      %p264 = scmp.ne.s32.totalorder %s259, %s261
      %p265 = scmp.eq.s32.totalorder %s31, 0
      %p266 = por %p264, %p265
      %p267 = scmp.ne.s32.totalorder %s259, %s261
      %p268 = scmp.eq.s32.totalorder %s36, 1
      %p269 = por %p267, %p268
      %p270 = scmp.ne.s32.totalorder %s261, %s262
      %p271 = scmp.eq.s32.totalorder %s36, 0
      %p272 = por %p270, %p271
      %p273 = scmp.ne.s32.totalorder %s261, %s262
      %p274 = scmp.eq.s32.totalorder %s37, 1
      %p275 = por %p273, %p274
      %p277 = scmp.ne.s32.totalorder %s262, %s276
      %p278 = scmp.eq.s32.totalorder %s37, 0
      %p279 = por %p277, %p278
      %s281 = sadd.s32 %s280, 1
      %p284 = scmp.eq.s32.totalorder %s31, 1
      %p285 = scmp.ne.s32.totalorder %s280, %s282
      %p286 = scmp.eq.s32.totalorder %s31, 0
      %p287 = por %p285, %p286
      %p288 = scmp.ne.s32.totalorder %s280, %s282
      %p289 = scmp.eq.s32.totalorder %s36, 1
      %p290 = por %p288, %p289
      %p291 = scmp.ne.s32.totalorder %s282, %s283
      %p292 = scmp.eq.s32.totalorder %s36, 0
      %p293 = por %p291, %p292
      %p294 = scmp.ne.s32.totalorder %s282, %s283
      %p295 = scmp.eq.s32.totalorder %s37, 1
      %p296 = por %p294, %p295
      %p298 = scmp.ne.s32.totalorder %s283, %s297
      %p299 = scmp.eq.s32.totalorder %s37, 0
      %p300 = por %p298, %p299
      %s301 = ssub.s32 %s31, %s38
      %p302 = scmp.eq.s32.totalorder %s301, 0
      %s304 = sadd.s32 %s303, 1
      %s305 = scalar_select %p302, %s303, %s304
      %p308 = pneg %p302
      %p309 = scmp.eq.s32.totalorder %s31, 1
      %p310 = por %p308, %p309
      %p311 = scmp.ne.s32.totalorder %s303, %s306
      %p312 = scmp.eq.s32.totalorder %s31, 0
      %p313 = por %p311, %p312
      %p314 = scmp.ne.s32.totalorder %s303, %s306
      %p315 = scmp.eq.s32.totalorder %s36, 1
      %p316 = por %p314, %p315
      %p317 = scmp.ne.s32.totalorder %s306, %s307
      %p318 = scmp.eq.s32.totalorder %s36, 0
      %p319 = por %p317, %p318
      %p320 = scmp.ne.s32.totalorder %s306, %s307
      %p321 = scmp.eq.s32.totalorder %s37, 1
      %p322 = por %p320, %p321
      %p324 = scmp.ne.s32.totalorder %s307, %s323
      %p325 = scmp.eq.s32.totalorder %s37, 0
      %p326 = por %p324, %p325
      %s327 = ssub.s32 %s31, %s38
      %p328 = scmp.eq.s32.totalorder %s327, 0
      %s330 = sadd.s32 %s329, 1
      %s331 = scalar_select %p328, %s329, %s330
      %p334 = pneg %p328
      %p335 = scmp.eq.s32.totalorder %s31, 1
      %p336 = por %p334, %p335
      %p337 = scmp.ne.s32.totalorder %s329, %s332
      %p338 = scmp.eq.s32.totalorder %s31, 0
      %p339 = por %p337, %p338
      %p340 = scmp.ne.s32.totalorder %s329, %s332
      %p341 = scmp.eq.s32.totalorder %s36, 1
      %p342 = por %p340, %p341
      %p343 = scmp.ne.s32.totalorder %s332, %s333
      %p344 = scmp.eq.s32.totalorder %s36, 0
      %p345 = por %p343, %p344
      %p346 = scmp.ne.s32.totalorder %s332, %s333
      %p347 = scmp.eq.s32.totalorder %s37, 1
      %p348 = por %p346, %p347
      %p350 = scmp.ne.s32.totalorder %s333, %s349
      %p351 = scmp.eq.s32.totalorder %s37, 0
      %p352 = por %p350, %p351
      %s353 = ssub.s32 %s31, %s38
      %p354 = scmp.eq.s32.totalorder %s353, 0
      %s356 = sadd.s32 %s355, 1
      %s357 = scalar_select %p354, %s355, %s356
      %p360 = pneg %p354
      %p361 = scmp.eq.s32.totalorder %s31, 1
      %p362 = por %p360, %p361
      %p363 = scmp.ne.s32.totalorder %s355, %s358
      %p364 = scmp.eq.s32.totalorder %s31, 0
      %p365 = por %p363, %p364
      %p366 = scmp.ne.s32.totalorder %s355, %s358
      %p367 = scmp.eq.s32.totalorder %s36, 1
      %p368 = por %p366, %p367
      %p369 = scmp.ne.s32.totalorder %s358, %s359
      %p370 = scmp.eq.s32.totalorder %s36, 0
      %p371 = por %p369, %p370
      %p372 = scmp.ne.s32.totalorder %s358, %s359
      %p373 = scmp.eq.s32.totalorder %s37, 1
      %p374 = por %p372, %p373
      %p376 = scmp.ne.s32.totalorder %s359, %s375
      %p377 = scmp.eq.s32.totalorder %s37, 0
      %p378 = por %p376, %p377
      %s379 = ssub.s32 %s31, %s38
      %p380 = scmp.eq.s32.totalorder %s379, 0
      %s382 = sadd.s32 %s381, 1
      %s383 = scalar_select %p380, %s381, %s382
      %p386 = pneg %p380
      %p387 = scmp.eq.s32.totalorder %s31, 1
      %p388 = por %p386, %p387
      %p389 = scmp.ne.s32.totalorder %s381, %s384
      %p390 = scmp.eq.s32.totalorder %s31, 0
      %p391 = por %p389, %p390
      %p392 = scmp.ne.s32.totalorder %s381, %s384
      %p393 = scmp.eq.s32.totalorder %s36, 1
      %p394 = por %p392, %p393
      %p395 = scmp.ne.s32.totalorder %s384, %s385
      %p396 = scmp.eq.s32.totalorder %s36, 0
      %p397 = por %p395, %p396
      %p398 = scmp.ne.s32.totalorder %s384, %s385
      %p399 = scmp.eq.s32.totalorder %s37, 1
      %p400 = por %p398, %p399
      %p402 = scmp.ne.s32.totalorder %s385, %s401
      %p403 = scmp.eq.s32.totalorder %s37, 0
      %p404 = por %p402, %p403
      %p405 = scmp.le.s32.totalorder 1, %s31
      %p406 = scmp.lt.s32.totalorder %s31, 3
      %p407 = pnand %p405, %p406
      %p408 = pneg %p407
      // Predicated region
      $region9: #{tpu_custom_call.1} parent=5 // pred_check
        _
      $region10: #{tpu_custom_call.1} parent=5 // pred_check_branch
        %410 = sbr.rel (%p407) target = $region12
      $region11: #{tpu_custom_call.1} parent=5 // pred_region
        %s411 = ssub.s32 %s31, 1
        // Predicated region
        $region13: #{tpu_custom_call.1} parent=11 // pred_check
          %p412 = pneg %p104
        $region14: #{tpu_custom_call.1} parent=11 // pred_check_branch
          %414 = sbr.rel (%p412) target = $region16
        $region15: #{tpu_custom_call.1} parent=11 // pred_region
          _
        $region16: #{tpu_custom_call.1} parent=11 // pred_fallthru
          _
        // Predicated region
        $region17: #{tpu_custom_call.1} parent=11 // pred_check
          %p415 = pneg %p125
        $region18: #{tpu_custom_call.1} parent=11 // pred_check_branch
          %417 = sbr.rel (%p415) target = $region20
        $region19: #{tpu_custom_call.1} parent=11 // pred_region
          _
        $region20: #{tpu_custom_call.1} parent=11 // pred_fallthru
          _
        // Predicated region
        $region21: #{tpu_custom_call.1} parent=11 // pred_check
          %p418 = pneg %p146
        $region22: #{tpu_custom_call.1} parent=11 // pred_check_branch
          %420 = sbr.rel (%p418) target = $region24
        $region23: #{tpu_custom_call.1} parent=11 // pred_region
          _
        $region24: #{tpu_custom_call.1} parent=11 // pred_fallthru
          _
        // Predicated region
        $region25: #{tpu_custom_call.1} parent=11 // pred_check
          %p421 = pneg %p167
        $region26: #{tpu_custom_call.1} parent=11 // pred_check_branch
          %423 = sbr.rel (%p421) target = $region28
        $region27: #{tpu_custom_call.1} parent=11 // pred_region
          _
        $region28: #{tpu_custom_call.1} parent=11 // pred_fallthru
          _
        // Predicated region
        $region29: #{tpu_custom_call.1} parent=11 // pred_check
          %p424 = pneg %p188
        $region30: #{tpu_custom_call.1} parent=11 // pred_check_branch
          %426 = sbr.rel (%p424) target = $region32
        $region31: #{tpu_custom_call.1} parent=11 // pred_region
          _
        $region32: #{tpu_custom_call.1} parent=11 // pred_fallthru
          _
        // Predicated region
        $region33: #{tpu_custom_call.1} parent=11 // pred_check
          %p427 = pneg %p209
        $region34: #{tpu_custom_call.1} parent=11 // pred_check_branch
          %429 = sbr.rel (%p427) target = $region36
        $region35: #{tpu_custom_call.1} parent=11 // pred_region
          _
        $region36: #{tpu_custom_call.1} parent=11 // pred_fallthru
          _
        // Predicated region
        $region37: #{tpu_custom_call.1} parent=11 // pred_check
          %p430 = pneg %p230
        $region38: #{tpu_custom_call.1} parent=11 // pred_check_branch
          %432 = sbr.rel (%p430) target = $region40
        $region39: #{tpu_custom_call.1} parent=11 // pred_region
          _
        $region40: #{tpu_custom_call.1} parent=11 // pred_fallthru
          _
        // Predicated region
        $region41: #{tpu_custom_call.1} parent=11 // pred_check
          %p433 = pneg %p251
        $region42: #{tpu_custom_call.1} parent=11 // pred_check_branch
          %435 = sbr.rel (%p433) target = $region44
        $region43: #{tpu_custom_call.1} parent=11 // pred_region
          _
        $region44: #{tpu_custom_call.1} parent=11 // pred_fallthru
          _
        // Predicated region
        $region45: #{tpu_custom_call.1} parent=11 // pred_check
          %p436 = pneg %p272
        $region46: #{tpu_custom_call.1} parent=11 // pred_check_branch
          %438 = sbr.rel (%p436) target = $region48
        $region47: #{tpu_custom_call.1} parent=11 // pred_region
          _
        $region48: #{tpu_custom_call.1} parent=11 // pred_fallthru
          _
        // Predicated region
        $region49: #{tpu_custom_call.1} parent=11 // pred_check
          %p439 = pneg %p293
        $region50: #{tpu_custom_call.1} parent=11 // pred_check_branch
          %441 = sbr.rel (%p439) target = $region52
        $region51: #{tpu_custom_call.1} parent=11 // pred_region
          _
        $region52: #{tpu_custom_call.1} parent=11 // pred_fallthru
          _
      $region12: #{tpu_custom_call.1} parent=5 // pred_fallthru
        _
      %p442 = scmp.lt.s32.totalorder %s31, 2
      // Predicated region
      $region53: #{tpu_custom_call.1} parent=5 // pred_check
        %p443 = pneg %p442
      $region54: #{tpu_custom_call.1} parent=5 // pred_check_branch
        %445 = sbr.rel (%p443) target = $region56
      $region55: #{tpu_custom_call.1} parent=5 // pred_region
        // Predicated region
        $region57: #{tpu_custom_call.1} parent=55 // pred_check
          %p446 = pneg %p51
        $region58: #{tpu_custom_call.1} parent=55 // pred_check_branch
          %448 = sbr.rel (%p446) target = $region60
        $region59: #{tpu_custom_call.1} parent=55 // pred_region
          %s449 = sand.u32 %s41, 1
          %s450 = sand.u32 %s41, 1
          %s451 = smul.addr %s450, 64
          %s452 = scalar_lea.vmem [#allocation2], %s451
          %s453 = smul.u32 8, %s31
          %s454 = smul.addr %s453, 4
          %s455 = scalar_lea.vmem %s0, %s454
          // Predicated region
          $region61: #{tpu_custom_call.1} parent=59 // pred_check
            _
          $region62: #{tpu_custom_call.1} parent=59 // pred_check_branch
            %457 = sbr.rel (0) target = $region64
          $region63: #{tpu_custom_call.1} parent=59 // pred_region
            // Predicated region
            $region65: #{tpu_custom_call.1} parent=63 // pred_check
              _
            $region66: #{tpu_custom_call.1} parent=63 // pred_check_branch
              %459 = sbr.rel (0) target = $region68
            $region67: #{tpu_custom_call.1} parent=63 // pred_region
              loop: start=0, step=1, limit=1
              $region69: #{tpu_custom_call.1} parent=67 // loop_pre_header
                _
              $region70: #{tpu_custom_call.1} parent=67 // loop_header
                %s461 = sphi 0, %s465
                %p462 = scmp.ge.s32.totalorder %s461, 1
                %s466 = sphi %s455, %s455
                %s467 = sphi %s452, %s452
              $region71: #{tpu_custom_call.1} parent=67 // loop_header_branch
                %464 = sbr.rel (%p462) target = $region75
              $region72: #{tpu_custom_call.1} parent=67 // loop_body
                %v468 = vld [vmem:[%s466] sm:$0xff]
                %469 = vst [vmem:[%s467] sm:$0xff] %v468
                %v470 = vld [vmem:[%s466 + $0x8] sm:$0xff]
                %471 = vst [vmem:[%s467 + $0x8] sm:$0xff] %v470
                %v472 = vld [vmem:[%s466 + $0x10] sm:$0xff]
                %473 = vst [vmem:[%s467 + $0x10] sm:$0xff] %v472
                %v474 = vld [vmem:[%s466 + $0x18] sm:$0xff]
                %475 = vst [vmem:[%s467 + $0x18] sm:$0xff] %v474
                %v476 = vld [vmem:[%s466 + $0x40] sm:$0xff]
                %477 = vst [vmem:[%s467 + $0x20] sm:$0xff] %v476
                %v478 = vld [vmem:[%s466 + $0x48] sm:$0xff]
                %479 = vst [vmem:[%s467 + $0x28] sm:$0xff] %v478
                %v480 = vld [vmem:[%s466 + $0x50] sm:$0xff]
                %481 = vst [vmem:[%s467 + $0x30] sm:$0xff] %v480
                %v482 = vld [vmem:[%s466 + $0x58] sm:$0xff]
                %483 = vst [vmem:[%s467 + $0x38] sm:$0xff] %v482
              $region73: #{tpu_custom_call.1} parent=67 // loop_footer
                %s465 = sadd.s32 1, %s461
              $region74: #{tpu_custom_call.1} parent=67 // loop_footer_branch
                %460 = sbr.rel target = $region70
              $region75: #{tpu_custom_call.1} parent=67 // loop_exit
                _
            $region68: #{tpu_custom_call.1} parent=63 // pred_fallthru
              _
            // Predicated region
            $region76: #{tpu_custom_call.1} parent=63 // pred_check
              _
            $region77: #{tpu_custom_call.1} parent=63 // pred_check_branch
              %485 = sbr.rel target = $region79
            $region78: #{tpu_custom_call.1} parent=63 // pred_region
              _
            $region79: #{tpu_custom_call.1} parent=63 // pred_fallthru
              _
          $region64: #{tpu_custom_call.1} parent=59 // pred_fallthru
            _
          %486 = vnop
        $region60: #{tpu_custom_call.1} parent=55 // pred_fallthru
          _
        // Predicated region
        $region80: #{tpu_custom_call.1} parent=55 // pred_check
          %p487 = pneg %p77
        $region81: #{tpu_custom_call.1} parent=55 // pred_check_branch
          %489 = sbr.rel (%p487) target = $region83
        $region82: #{tpu_custom_call.1} parent=55 // pred_region
          %s490 = sand.u32 %s67, 1
          %s491 = scalar_lea.sflag [#allocation4], %s490
          %s492 = sand.u32 %s67, 1
          %s493 = smul.addr %s492, 32
          %s494 = scalar_lea.vmem [#allocation3], %s493
          %s495 = smul.u32 8, %s31
          %s497 = ssub.s32 512, 512
          %498 = vsyncadd %s491, %s497
          %s499 = smul.addr %s495, 64
          %s500 = scalar_lea.hbm %s1, %s499
          %s502 = sshll.u32 %s494, 4
          %s503 = int_to_ptr.vmem [resolvable:$true] %s502
          %505 = dma.hbm_to_vmem [thread:$0]  %s500, 512, %s503, %s491
        $region83: #{tpu_custom_call.1} parent=55 // pred_fallthru
          _
      $region56: #{tpu_custom_call.1} parent=5 // pred_fallthru
        _
      %p506 = scmp.le.s32.totalorder 1, %s31
      %p507 = scmp.lt.s32.totalorder %s31, 3
      %p508 = pnand %p506, %p507
      %p509 = pneg %p508
      // Predicated region
      $region84: #{tpu_custom_call.1} parent=5 // pred_check
        _
      $region85: #{tpu_custom_call.1} parent=5 // pred_check_branch
        %511 = sbr.rel (%p508) target = $region87
      $region86: #{tpu_custom_call.1} parent=5 // pred_region
        %s512 = ssub.s32 %s31, 1
        %s513 = sand.u32 %s44, 1
        %s514 = sand.u32 %s44, 1
        %s515 = smul.addr %s514, 64
        %s516 = scalar_lea.vmem [#allocation2], %s515
        // Predicated region
        $region88: #{tpu_custom_call.1} parent=86 // pred_check
          %p517 = pneg %p57
        $region89: #{tpu_custom_call.1} parent=86 // pred_check_branch
          %519 = sbr.rel (%p517) target = $region91
        $region90: #{tpu_custom_call.1} parent=86 // pred_region
          _
        $region91: #{tpu_custom_call.1} parent=86 // pred_fallthru
          _
        %s520 = sand.u32 %s70, 1
        %s521 = scalar_lea.sflag [#allocation4], %s520
        %s522 = sand.u32 %s70, 1
        %s523 = smul.addr %s522, 32
        %s524 = scalar_lea.vmem [#allocation3], %s523
        // Predicated region
        $region92: #{tpu_custom_call.1} parent=86 // pred_check
          %p525 = pneg %p83
        $region93: #{tpu_custom_call.1} parent=86 // pred_check_branch
          %527 = sbr.rel (%p525) target = $region95
        $region94: #{tpu_custom_call.1} parent=86 // pred_region
          %528 = dma.done %s521, 512
        $region95: #{tpu_custom_call.1} parent=86 // pred_fallthru
          _
        %s529 = sand.u32 %s44, 1
        %s530 = sand.u32 %s44, 1
        %s531 = smul.addr %s530, 64
        %s532 = scalar_lea.vmem [#allocation2], %s531
        %p533 = pneg %p57
        %p534 = pneg %p54
        %s535 = sand.u32 %s70, 1
        %s536 = scalar_lea.sflag [#allocation4], %s535
        %s537 = sand.u32 %s70, 1
        %s538 = smul.addr %s537, 32
        %s539 = scalar_lea.vmem [#allocation3], %s538
        %p540 = pneg %p83
        %p541 = pneg %p80
        %p542 = pneg %p104
        %p543 = pneg %p101
        %p544 = pneg %p125
        %p545 = pneg %p122
        %p546 = pneg %p146
        %p547 = pneg %p143
        %p548 = pneg %p167
        %p549 = pneg %p164
        %p550 = pneg %p188
        %p551 = pneg %p185
        %p552 = pneg %p209
        %p553 = pneg %p206
        %p554 = pneg %p230
        %p555 = pneg %p227
        %p556 = pneg %p251
        %p557 = pneg %p248
        %p558 = pneg %p272
        %p559 = pneg %p269
        %p560 = pneg %p293
        %p561 = pneg %p290
        %p562 = pneg %p319
        %p563 = pneg %p316
        %s564 = sand.u32 %s306, 1
        %s565 = scalar_lea.sflag [#allocation5], %s564
        %s566 = sand.u32 %s306, 1
        %s567 = smul.addr %s566, 64
        %s568 = scalar_lea.vmem [#allocation6], %s567
        %p569 = pneg %p345
        %p570 = pneg %p342
        %s571 = sand.u32 %s36, 1
        %s572 = scalar_lea.sflag [#allocation8], %s571
        %s573 = sand.u32 %s332, 1
        %s574 = smul.addr %s573, 32
        %s575 = scalar_lea.vmem [#allocation7], %s574
        %p576 = pneg %p371
        %p577 = pneg %p368
        %s578 = sand.u32 %s36, 1
        %s579 = scalar_lea.sflag [#allocation8], %s578
        %s580 = sand.u32 %s358, 1
        %s581 = smul.addr %s580, 32
        %s582 = scalar_lea.vmem [#allocation9], %s581
        %p583 = pneg %p397
        %p584 = pneg %p394
        %p585 = scmp.lt.s32.totalorder %s36, 1
        %s586 = scalar_select %p585, %s36, 1
        %s587 = scalar_lea.vmem %s15, %s586
        %s588 = smul.u32 8, %s36
        %s589 = smul.u32 8, %s36
        %s590 = smul.u32 8, %s36
        %s591 = smul.u32 8, %s36
        %s592 = smul.u32 8, %s36
        %p593 = scmp.lt.s32.totalorder %s36, 1
        %s594 = scalar_select %p593, %s36, 1
        %s595 = scalar_lea.vmem %s15, %s594
        %v597 = vld [vmem:[%s2] sm:$0xf]
        %v598 = vld [vmem:[%s2 + $0x4] sm:$0xf]
        %v599 = vld [vmem:[%s2 + $0x8] sm:$0xf]
        %v600 = vld [vmem:[%s2 + $0xc] sm:$0xf]
        %v601 = vld [vmem:[%s516] sm:$0xff]
        %v602 = vld [vmem:[%s516 + $0x8] sm:$0xff]
        %v603 = vld [vmem:[%s516 + $0x10] sm:$0xff]
        %v604 = vld [vmem:[%s516 + $0x18] sm:$0xff]
        %v605 = vld [vmem:[%s516 + $0x20] sm:$0xff]
        %v606 = vld [vmem:[%s516 + $0x28] sm:$0xff]
        %v607 = vld [vmem:[%s516 + $0x30] sm:$0xff]
        %v608 = vld [vmem:[%s516 + $0x38] sm:$0xff]
        %v609 = vld [vmem:[%s3] sm:$0xff]
        %v610 = vld [vmem:[%s3 + $0x8] sm:$0xff]
        %v611 = vld [vmem:[%s3 + $0x10] sm:$0xff]
        %v612 = vld [vmem:[%s3 + $0x18] sm:$0xff]
        %614 = vset.pattern.permute.xlu0 0
        %615 = vperm.xlu0 %614, %v609
        %v616 = vpop.permute.xlu0 %615
        %619 = vset.pattern.permute.xlu0 0
        %620 = vperm.xlu0 %619, %v610
        %v621 = vpop.permute.xlu0 %620
        %624 = vset.pattern.permute.xlu0 0
        %625 = vperm.xlu0 %624, %v611
        %v626 = vpop.permute.xlu0 %625
        %629 = vset.pattern.permute.xlu0 0
        %630 = vperm.xlu0 %629, %v612
        %v631 = vpop.permute.xlu0 %630
        %v637 = vunpack.c.l.b16 %v597
        %v638 = vunpack.c.l.b16 %v598
        %v639 = vunpack.c.l.b16 %v599
        %v640 = vunpack.c.l.b16 %v600
        %v641 = vpack.c.b16 %v638, %v637
        %v642 = vpack.c.b16 %v640, %v639
        %v651 = vunpack.c.l.b16 %v601
        %v652 = vunpack.c.h.b16 %v601
        %v653 = vunpack.c.l.b16 %v602
        %v654 = vunpack.c.h.b16 %v602
        %v655 = vunpack.c.l.b16 %v603
        %v656 = vunpack.c.h.b16 %v603
        %v657 = vunpack.c.l.b16 %v604
        %v658 = vunpack.c.h.b16 %v604
        %v659 = vunpack.c.l.b16 %v605
        %v660 = vunpack.c.h.b16 %v605
        %v661 = vunpack.c.l.b16 %v606
        %v662 = vunpack.c.h.b16 %v606
        %v663 = vunpack.c.l.b16 %v607
        %v664 = vunpack.c.h.b16 %v607
        %v665 = vunpack.c.l.b16 %v608
        %v666 = vunpack.c.h.b16 %v608
        %v667 = vpack.c.b16 %v659, %v651
        %v668 = vpack.c.b16 %v660, %v652
        %v669 = vpack.c.b16 %v661, %v653
        %v670 = vpack.c.b16 %v662, %v654
        %v671 = vpack.c.b16 %v663, %v655
        %v672 = vpack.c.b16 %v664, %v656
        %v673 = vpack.c.b16 %v665, %v657
        %v674 = vpack.c.b16 %v666, %v658
        %vm683 = vcmask 130048
        %v685 = vsel %vm683, %v641, 0
        %v688 = vsel %vm683, %v642, 0
        %690 = vmatprep.subr.bf16.mxu0 %v668
        %691 = vmatpush1.bf16.msra.mxu0 %v667
        %692 = vmatprep.subr.bf16.mxu0 0
        %693 = vmatpush1.bf16.msra.mxu0 0
        %694 = vmatprep.subr.bf16.mxu0 0
        %695 = vmatpush1.bf16.msra.mxu0 0
        %696 = vmatprep.subr.bf16.mxu0 0
        %697 = vmatpush1.bf16.msra.mxu0 0
        %698 = vmatprep.subr.bf16.mxu0 0
        %699 = vmatpush1.bf16.msra.mxu0 0
        %700 = vmatprep.subr.bf16.mxu0 0
        %701 = vmatpush1.bf16.msra.mxu0 0
        %702 = vmatprep.subr.bf16.mxu0 0
        %703 = vmatpush1.bf16.msra.mxu0 0
        %704 = vmatprep.subr.bf16.mxu0 0
        %705 = vmatpush1.bf16.msra.mxu0 0
        %706 = vmatprep.subr.bf16.mxu0 0
        %707 = vmatpush1.bf16.msra.mxu0 0
        %708 = vmatprep.subr.bf16.mxu0 0
        %709 = vmatpush1.bf16.msra.mxu0 0
        %710 = vmatprep.subr.bf16.mxu0 0
        %711 = vmatpush1.bf16.msra.mxu0 0
        %712 = vmatprep.subr.bf16.mxu0 0
        %713 = vmatpush1.bf16.msra.mxu0 0
        %714 = vmatprep.subr.bf16.mxu0 0
        %715 = vmatpush1.bf16.msra.mxu0 0
        %716 = vmatprep.subr.bf16.mxu0 0
        %717 = vmatpush1.bf16.msra.mxu0 0
        %718 = vmatprep.subr.bf16.mxu0 0
        %719 = vmatpush1.bf16.msra.mxu0 0
        %720 = vmatprep.subr.bf16.mxu0 0
        %721 = vmatpush1.bf16.msra.mxu0 0
        %722 = vmatprep.mubr.bf16.mxu0 0
        %723 = vmatmul.mubr.bf16.gmra.mrb[0].mxu0 %v685
        %v724 = vpop.f32.mrb[0].mxu0
        %v725 = vadd.f32 %v616, %v724
        %v726 = vpop.f32.mrb[0].mxu0
        %v727 = vadd.f32 %v616, %v726
        %v728 = vpop.f32.mrb[0].mxu0
        %v729 = vadd.f32 %v621, %v728
        %v730 = vpop.f32.mrb[0].mxu0
        %v731 = vadd.f32 %v621, %v730
        %732 = vmatprep.mubr.bf16.mxu0 0
        %733 = vmatmul.mubr.bf16.gmra.mrb[0].mxu0 %v688
        %v734 = vpop.f32.mrb[0].mxu0
        %v735 = vadd.f32 %v626, %v734
        %v736 = vpop.f32.mrb[0].mxu0
        %v737 = vadd.f32 %v626, %v736
        %v738 = vpop.f32.mrb[0].mxu0
        %v739 = vadd.f32 %v631, %v738
        %v740 = vpop.f32.mrb[0].mxu0
        %v741 = vadd.f32 %v631, %v740
        %742 = vdwg.mxu0
        %743 = vmatprep.subr.bf16.mxu0 %v670
        %744 = vmatpush1.bf16.msra.mxu0 %v669
        %745 = vmatprep.subr.bf16.mxu0 0
        %746 = vmatpush1.bf16.msra.mxu0 0
        %747 = vmatprep.subr.bf16.mxu0 0
        %748 = vmatpush1.bf16.msra.mxu0 0
        %749 = vmatprep.subr.bf16.mxu0 0
        %750 = vmatpush1.bf16.msra.mxu0 0
        %751 = vmatprep.subr.bf16.mxu0 0
        %752 = vmatpush1.bf16.msra.mxu0 0
        %753 = vmatprep.subr.bf16.mxu0 0
        %754 = vmatpush1.bf16.msra.mxu0 0
        %755 = vmatprep.subr.bf16.mxu0 0
        %756 = vmatpush1.bf16.msra.mxu0 0
        %757 = vmatprep.subr.bf16.mxu0 0
        %758 = vmatpush1.bf16.msra.mxu0 0
        %759 = vmatprep.subr.bf16.mxu0 0
        %760 = vmatpush1.bf16.msra.mxu0 0
        %761 = vmatprep.subr.bf16.mxu0 0
        %762 = vmatpush1.bf16.msra.mxu0 0
        %763 = vmatprep.subr.bf16.mxu0 0
        %764 = vmatpush1.bf16.msra.mxu0 0
        %765 = vmatprep.subr.bf16.mxu0 0
        %766 = vmatpush1.bf16.msra.mxu0 0
        %767 = vmatprep.subr.bf16.mxu0 0
        %768 = vmatpush1.bf16.msra.mxu0 0
        %769 = vmatprep.subr.bf16.mxu0 0
        %770 = vmatpush1.bf16.msra.mxu0 0
        %771 = vmatprep.subr.bf16.mxu0 0
        %772 = vmatpush1.bf16.msra.mxu0 0
        %773 = vmatprep.subr.bf16.mxu0 0
        %774 = vmatpush1.bf16.msra.mxu0 0
        %775 = vmatprep.mubr.bf16.mxu0 0
        %776 = vmatmul.mubr.bf16.gmra.mrb[0].mxu0 %v685
        %v777 = vpop.f32.mrb[0].mxu0
        %v778 = vadd.f32 %v616, %v777
        %v779 = vpop.f32.mrb[0].mxu0
        %v780 = vadd.f32 %v616, %v779
        %v781 = vpop.f32.mrb[0].mxu0
        %v782 = vadd.f32 %v621, %v781
        %v783 = vpop.f32.mrb[0].mxu0
        %v784 = vadd.f32 %v621, %v783
        %785 = vmatprep.mubr.bf16.mxu0 0
        %786 = vmatmul.mubr.bf16.gmra.mrb[0].mxu0 %v688
        %v787 = vpop.f32.mrb[0].mxu0
        %v788 = vadd.f32 %v626, %v787
        %v789 = vpop.f32.mrb[0].mxu0
        %v790 = vadd.f32 %v626, %v789
        %v791 = vpop.f32.mrb[0].mxu0
        %v792 = vadd.f32 %v631, %v791
        %v793 = vpop.f32.mrb[0].mxu0
        %v794 = vadd.f32 %v631, %v793
        %795 = vdwg.mxu0
        %796 = vmatprep.subr.bf16.mxu0 %v672
        %797 = vmatpush1.bf16.msra.mxu0 %v671
        %798 = vmatprep.subr.bf16.mxu0 0
        %799 = vmatpush1.bf16.msra.mxu0 0
        %800 = vmatprep.subr.bf16.mxu0 0
        %801 = vmatpush1.bf16.msra.mxu0 0
        %802 = vmatprep.subr.bf16.mxu0 0
        %803 = vmatpush1.bf16.msra.mxu0 0
        %804 = vmatprep.subr.bf16.mxu0 0
        %805 = vmatpush1.bf16.msra.mxu0 0
        %806 = vmatprep.subr.bf16.mxu0 0
        %807 = vmatpush1.bf16.msra.mxu0 0
        %808 = vmatprep.subr.bf16.mxu0 0
        %809 = vmatpush1.bf16.msra.mxu0 0
        %810 = vmatprep.subr.bf16.mxu0 0
        %811 = vmatpush1.bf16.msra.mxu0 0
        %812 = vmatprep.subr.bf16.mxu0 0
        %813 = vmatpush1.bf16.msra.mxu0 0
        %814 = vmatprep.subr.bf16.mxu0 0
        %815 = vmatpush1.bf16.msra.mxu0 0
        %816 = vmatprep.subr.bf16.mxu0 0
        %817 = vmatpush1.bf16.msra.mxu0 0
        %818 = vmatprep.subr.bf16.mxu0 0
        %819 = vmatpush1.bf16.msra.mxu0 0
        %820 = vmatprep.subr.bf16.mxu0 0
        %821 = vmatpush1.bf16.msra.mxu0 0
        %822 = vmatprep.subr.bf16.mxu0 0
        %823 = vmatpush1.bf16.msra.mxu0 0
        %824 = vmatprep.subr.bf16.mxu0 0
        %825 = vmatpush1.bf16.msra.mxu0 0
        %826 = vmatprep.subr.bf16.mxu0 0
        %827 = vmatpush1.bf16.msra.mxu0 0
        %828 = vmatprep.mubr.bf16.mxu0 0
        %829 = vmatmul.mubr.bf16.gmra.mrb[0].mxu0 %v685
        %v830 = vpop.f32.mrb[0].mxu0
        %v831 = vadd.f32 %v616, %v830
        %v832 = vpop.f32.mrb[0].mxu0
        %v833 = vadd.f32 %v616, %v832
        %v834 = vpop.f32.mrb[0].mxu0
        %v835 = vadd.f32 %v621, %v834
        %v836 = vpop.f32.mrb[0].mxu0
        %v837 = vadd.f32 %v621, %v836
        %838 = vmatprep.mubr.bf16.mxu0 0
        %839 = vmatmul.mubr.bf16.gmra.mrb[0].mxu0 %v688
        %v840 = vpop.f32.mrb[0].mxu0
        %v841 = vadd.f32 %v626, %v840
        %v842 = vpop.f32.mrb[0].mxu0
        %v843 = vadd.f32 %v626, %v842
        %v844 = vpop.f32.mrb[0].mxu0
        %v845 = vadd.f32 %v631, %v844
        %v846 = vpop.f32.mrb[0].mxu0
        %v847 = vadd.f32 %v631, %v846
        %848 = vdwg.mxu0
        %849 = vmatprep.subr.bf16.mxu0 %v674
        %850 = vmatpush1.bf16.msra.mxu0 %v673
        %851 = vmatprep.subr.bf16.mxu0 0
        %852 = vmatpush1.bf16.msra.mxu0 0
        %853 = vmatprep.subr.bf16.mxu0 0
        %854 = vmatpush1.bf16.msra.mxu0 0
        %855 = vmatprep.subr.bf16.mxu0 0
        %856 = vmatpush1.bf16.msra.mxu0 0
        %857 = vmatprep.subr.bf16.mxu0 0
        %858 = vmatpush1.bf16.msra.mxu0 0
        %859 = vmatprep.subr.bf16.mxu0 0
        %860 = vmatpush1.bf16.msra.mxu0 0
        %861 = vmatprep.subr.bf16.mxu0 0
        %862 = vmatpush1.bf16.msra.mxu0 0
        %863 = vmatprep.subr.bf16.mxu0 0
        %864 = vmatpush1.bf16.msra.mxu0 0
        %865 = vmatprep.subr.bf16.mxu0 0
        %866 = vmatpush1.bf16.msra.mxu0 0
        %867 = vmatprep.subr.bf16.mxu0 0
        %868 = vmatpush1.bf16.msra.mxu0 0
        %869 = vmatprep.subr.bf16.mxu0 0
        %870 = vmatpush1.bf16.msra.mxu0 0
        %871 = vmatprep.subr.bf16.mxu0 0
        %872 = vmatpush1.bf16.msra.mxu0 0
        %873 = vmatprep.subr.bf16.mxu0 0
        %874 = vmatpush1.bf16.msra.mxu0 0
        %875 = vmatprep.subr.bf16.mxu0 0
        %876 = vmatpush1.bf16.msra.mxu0 0
        %877 = vmatprep.subr.bf16.mxu0 0
        %878 = vmatpush1.bf16.msra.mxu0 0
        %879 = vmatprep.subr.bf16.mxu0 0
        %880 = vmatpush1.bf16.msra.mxu0 0
        %881 = vmatprep.mubr.bf16.mxu0 0
        %882 = vmatmul.mubr.bf16.gmra.mrb[0].mxu0 %v685
        %v883 = vpop.f32.mrb[0].mxu0
        %v884 = vadd.f32 %v616, %v883
        %v885 = vpop.f32.mrb[0].mxu0
        %v886 = vadd.f32 %v616, %v885
        %v887 = vpop.f32.mrb[0].mxu0
        %v888 = vadd.f32 %v621, %v887
        %v889 = vpop.f32.mrb[0].mxu0
        %v890 = vadd.f32 %v621, %v889
        %891 = vmatprep.mubr.bf16.mxu0 0
        %892 = vmatmul.mubr.bf16.gmra.mrb[0].mxu0 %v688
        %v893 = vpop.f32.mrb[0].mxu0
        %v894 = vadd.f32 %v626, %v893
        %v895 = vpop.f32.mrb[0].mxu0
        %v896 = vadd.f32 %v626, %v895
        %v897 = vpop.f32.mrb[0].mxu0
        %v898 = vadd.f32 %v631, %v897
        %v899 = vpop.f32.mrb[0].mxu0
        %v900 = vadd.f32 %v631, %v899
        %901 = vdwg.mxu0
        %v902 = vmax.f32 %v725, 0.0
        %v903 = vmax.f32 %v727, 0.0
        %v904 = vmax.f32 %v778, 0.0
        %v905 = vmax.f32 %v780, 0.0
        %v906 = vmax.f32 %v831, 0.0
        %v907 = vmax.f32 %v833, 0.0
        %v908 = vmax.f32 %v884, 0.0
        %v909 = vmax.f32 %v886, 0.0
        %v910 = vmax.f32 %v729, 0.0
        %v911 = vmax.f32 %v731, 0.0
        %v912 = vmax.f32 %v782, 0.0
        %v913 = vmax.f32 %v784, 0.0
        %v914 = vmax.f32 %v835, 0.0
        %v915 = vmax.f32 %v837, 0.0
        %v916 = vmax.f32 %v888, 0.0
        %v917 = vmax.f32 %v890, 0.0
        %v918 = vmax.f32 %v735, 0.0
        %v919 = vmax.f32 %v737, 0.0
        %v920 = vmax.f32 %v788, 0.0
        %v921 = vmax.f32 %v790, 0.0
        %v922 = vmax.f32 %v841, 0.0
        %v923 = vmax.f32 %v843, 0.0
        %v924 = vmax.f32 %v894, 0.0
        %v925 = vmax.f32 %v896, 0.0
        %v926 = vmax.f32 %v739, 0.0
        %v927 = vmax.f32 %v741, 0.0
        %v928 = vmax.f32 %v792, 0.0
        %v929 = vmax.f32 %v794, 0.0
        %v930 = vmax.f32 %v845, 0.0
        %v931 = vmax.f32 %v847, 0.0
        %v932 = vmax.f32 %v898, 0.0
        %v933 = vmax.f32 %v900, 0.0
        %v934 = vpack.c.bf16 %v910, %v902
        %v935 = vpack.c.bf16 %v911, %v903
        %v936 = vpack.c.bf16 %v912, %v904
        %v937 = vpack.c.bf16 %v913, %v905
        %v938 = vpack.c.bf16 %v914, %v906
        %v939 = vpack.c.bf16 %v915, %v907
        %v940 = vpack.c.bf16 %v916, %v908
        %v941 = vpack.c.bf16 %v917, %v909
        %v942 = vpack.c.bf16 %v926, %v918
        %v943 = vpack.c.bf16 %v927, %v919
        %v944 = vpack.c.bf16 %v928, %v920
        %v945 = vpack.c.bf16 %v929, %v921
        %v946 = vpack.c.bf16 %v930, %v922
        %v947 = vpack.c.bf16 %v931, %v923
        %v948 = vpack.c.bf16 %v932, %v924
        %v949 = vpack.c.bf16 %v933, %v925
        %v950 = vld [vmem:[%s4] sm:$0xf]
        %v951 = vld [vmem:[%s4 + $0x4] sm:$0xf]
        %v952 = vld [vmem:[%s5] sm:$0xff]
        %v953 = vld [vmem:[%s5 + $0x8] sm:$0xff]
        %955 = vset.pattern.permute.xlu0 0
        %956 = vperm.xlu0 %955, %v952
        %v957 = vpop.permute.xlu0 %956
        %960 = vset.pattern.permute.xlu0 0
        %961 = vperm.xlu0 %960, %v953
        %v962 = vpop.permute.xlu0 %961
        %v966 = vunpack.c.l.b16 %v950
        %v967 = vunpack.c.l.b16 %v951
        %v968 = vpack.c.b16 %v967, %v966
        %vm969 = vcmask 261120
        %v971 = vsel %vm969, %v968, 0
        %973 = vmatprep.subr.bf16.mxu0 %v935
        %974 = vmatpush1.bf16.msra.mxu0 %v934
        %975 = vmatprep.subr.bf16.mxu0 %v943
        %976 = vmatpush1.bf16.msra.mxu0 %v942
        %977 = vmatprep.subr.bf16.mxu0 0
        %978 = vmatpush1.bf16.msra.mxu0 0
        %979 = vmatprep.subr.bf16.mxu0 0
        %980 = vmatpush1.bf16.msra.mxu0 0
        %981 = vmatprep.subr.bf16.mxu0 0
        %982 = vmatpush1.bf16.msra.mxu0 0
        %983 = vmatprep.subr.bf16.mxu0 0
        %984 = vmatpush1.bf16.msra.mxu0 0
        %985 = vmatprep.subr.bf16.mxu0 0
        %986 = vmatpush1.bf16.msra.mxu0 0
        %987 = vmatprep.subr.bf16.mxu0 0
        %988 = vmatpush1.bf16.msra.mxu0 0
        %989 = vmatprep.subr.bf16.mxu0 0
        %990 = vmatpush1.bf16.msra.mxu0 0
        %991 = vmatprep.subr.bf16.mxu0 0
        %992 = vmatpush1.bf16.msra.mxu0 0
        %993 = vmatprep.subr.bf16.mxu0 0
        %994 = vmatpush1.bf16.msra.mxu0 0
        %995 = vmatprep.subr.bf16.mxu0 0
        %996 = vmatpush1.bf16.msra.mxu0 0
        %997 = vmatprep.subr.bf16.mxu0 0
        %998 = vmatpush1.bf16.msra.mxu0 0
        %999 = vmatprep.subr.bf16.mxu0 0
        %1000 = vmatpush1.bf16.msra.mxu0 0
        %1001 = vmatprep.subr.bf16.mxu0 0
        %1002 = vmatpush1.bf16.msra.mxu0 0
        %1003 = vmatprep.subr.bf16.mxu0 0
        %1004 = vmatpush1.bf16.msra.mxu0 0
        %1005 = vmatprep.mubr.bf16.mxu0 0
        %1006 = vmatmul.mubr.bf16.gmra.mrb[0].mxu0 %v971
        %v1007 = vpop.f32.mrb[0].mxu0
        %v1008 = vadd.f32 %v957, %v1007
        %v1009 = vpop.f32.mrb[0].mxu0
        %v1010 = vadd.f32 %v957, %v1009
        %v1011 = vpop.f32.mrb[0].mxu0
        %v1012 = vadd.f32 %v962, %v1011
        %v1013 = vpop.f32.mrb[0].mxu0
        %v1014 = vadd.f32 %v962, %v1013
        %1015 = vdwg.mxu0
        %1016 = vmatprep.subr.bf16.mxu0 %v937
        %1017 = vmatpush1.bf16.msra.mxu0 %v936
        %1018 = vmatprep.subr.bf16.mxu0 %v945
        %1019 = vmatpush1.bf16.msra.mxu0 %v944
        %1020 = vmatprep.subr.bf16.mxu0 0
        %1021 = vmatpush1.bf16.msra.mxu0 0
        %1022 = vmatprep.subr.bf16.mxu0 0
        %1023 = vmatpush1.bf16.msra.mxu0 0
        %1024 = vmatprep.subr.bf16.mxu0 0
        %1025 = vmatpush1.bf16.msra.mxu0 0
        %1026 = vmatprep.subr.bf16.mxu0 0
        %1027 = vmatpush1.bf16.msra.mxu0 0
        %1028 = vmatprep.subr.bf16.mxu0 0
        %1029 = vmatpush1.bf16.msra.mxu0 0
        %1030 = vmatprep.subr.bf16.mxu0 0
        %1031 = vmatpush1.bf16.msra.mxu0 0
        %1032 = vmatprep.subr.bf16.mxu0 0
        %1033 = vmatpush1.bf16.msra.mxu0 0
        %1034 = vmatprep.subr.bf16.mxu0 0
        %1035 = vmatpush1.bf16.msra.mxu0 0
        %1036 = vmatprep.subr.bf16.mxu0 0
        %1037 = vmatpush1.bf16.msra.mxu0 0
        %1038 = vmatprep.subr.bf16.mxu0 0
        %1039 = vmatpush1.bf16.msra.mxu0 0
        %1040 = vmatprep.subr.bf16.mxu0 0
        %1041 = vmatpush1.bf16.msra.mxu0 0
        %1042 = vmatprep.subr.bf16.mxu0 0
        %1043 = vmatpush1.bf16.msra.mxu0 0
        %1044 = vmatprep.subr.bf16.mxu0 0
        %1045 = vmatpush1.bf16.msra.mxu0 0
        %1046 = vmatprep.subr.bf16.mxu0 0
        %1047 = vmatpush1.bf16.msra.mxu0 0
        %1048 = vmatprep.mubr.bf16.mxu0 0
        %1049 = vmatmul.mubr.bf16.gmra.mrb[0].mxu0 %v971
        %v1050 = vpop.f32.mrb[0].mxu0
        %v1051 = vadd.f32 %v957, %v1050
        %v1052 = vpop.f32.mrb[0].mxu0
        %v1053 = vadd.f32 %v957, %v1052
        %v1054 = vpop.f32.mrb[0].mxu0
        %v1055 = vadd.f32 %v962, %v1054
        %v1056 = vpop.f32.mrb[0].mxu0
        %v1057 = vadd.f32 %v962, %v1056
        %1058 = vdwg.mxu0
        %1059 = vmatprep.subr.bf16.mxu0 %v939
        %1060 = vmatpush1.bf16.msra.mxu0 %v938
        %1061 = vmatprep.subr.bf16.mxu0 %v947
        %1062 = vmatpush1.bf16.msra.mxu0 %v946
        %1063 = vmatprep.subr.bf16.mxu0 0
        %1064 = vmatpush1.bf16.msra.mxu0 0
        %1065 = vmatprep.subr.bf16.mxu0 0
        %1066 = vmatpush1.bf16.msra.mxu0 0
        %1067 = vmatprep.subr.bf16.mxu0 0
        %1068 = vmatpush1.bf16.msra.mxu0 0
        %1069 = vmatprep.subr.bf16.mxu0 0
        %1070 = vmatpush1.bf16.msra.mxu0 0
        %1071 = vmatprep.subr.bf16.mxu0 0
        %1072 = vmatpush1.bf16.msra.mxu0 0
        %1073 = vmatprep.subr.bf16.mxu0 0
        %1074 = vmatpush1.bf16.msra.mxu0 0
        %1075 = vmatprep.subr.bf16.mxu0 0
        %1076 = vmatpush1.bf16.msra.mxu0 0
        %1077 = vmatprep.subr.bf16.mxu0 0
        %1078 = vmatpush1.bf16.msra.mxu0 0
        %1079 = vmatprep.subr.bf16.mxu0 0
        %1080 = vmatpush1.bf16.msra.mxu0 0
        %1081 = vmatprep.subr.bf16.mxu0 0
        %1082 = vmatpush1.bf16.msra.mxu0 0
        %1083 = vmatprep.subr.bf16.mxu0 0
        %1084 = vmatpush1.bf16.msra.mxu0 0
        %1085 = vmatprep.subr.bf16.mxu0 0
        %1086 = vmatpush1.bf16.msra.mxu0 0
        %1087 = vmatprep.subr.bf16.mxu0 0
        %1088 = vmatpush1.bf16.msra.mxu0 0
        %1089 = vmatprep.subr.bf16.mxu0 0
        %1090 = vmatpush1.bf16.msra.mxu0 0
        %1091 = vmatprep.mubr.bf16.mxu0 0
        %1092 = vmatmul.mubr.bf16.gmra.mrb[0].mxu0 %v971
        %v1093 = vpop.f32.mrb[0].mxu0
        %v1094 = vadd.f32 %v957, %v1093
        %v1095 = vpop.f32.mrb[0].mxu0
        %v1096 = vadd.f32 %v957, %v1095
        %v1097 = vpop.f32.mrb[0].mxu0
        %v1098 = vadd.f32 %v962, %v1097
        %v1099 = vpop.f32.mrb[0].mxu0
        %v1100 = vadd.f32 %v962, %v1099
        %1101 = vdwg.mxu0
        %1102 = vmatprep.subr.bf16.mxu0 %v941
        %1103 = vmatpush1.bf16.msra.mxu0 %v940
        %1104 = vmatprep.subr.bf16.mxu0 %v949
        %1105 = vmatpush1.bf16.msra.mxu0 %v948
        %1106 = vmatprep.subr.bf16.mxu0 0
        %1107 = vmatpush1.bf16.msra.mxu0 0
        %1108 = vmatprep.subr.bf16.mxu0 0
        %1109 = vmatpush1.bf16.msra.mxu0 0
        %1110 = vmatprep.subr.bf16.mxu0 0
        %1111 = vmatpush1.bf16.msra.mxu0 0
        %1112 = vmatprep.subr.bf16.mxu0 0
        %1113 = vmatpush1.bf16.msra.mxu0 0
        %1114 = vmatprep.subr.bf16.mxu0 0
        %1115 = vmatpush1.bf16.msra.mxu0 0
        %1116 = vmatprep.subr.bf16.mxu0 0
        %1117 = vmatpush1.bf16.msra.mxu0 0
        %1118 = vmatprep.subr.bf16.mxu0 0
        %1119 = vmatpush1.bf16.msra.mxu0 0
        %1120 = vmatprep.subr.bf16.mxu0 0
        %1121 = vmatpush1.bf16.msra.mxu0 0
        %1122 = vmatprep.subr.bf16.mxu0 0
        %1123 = vmatpush1.bf16.msra.mxu0 0
        %1124 = vmatprep.subr.bf16.mxu0 0
        %1125 = vmatpush1.bf16.msra.mxu0 0
        %1126 = vmatprep.subr.bf16.mxu0 0
        %1127 = vmatpush1.bf16.msra.mxu0 0
        %1128 = vmatprep.subr.bf16.mxu0 0
        %1129 = vmatpush1.bf16.msra.mxu0 0
        %1130 = vmatprep.subr.bf16.mxu0 0
        %1131 = vmatpush1.bf16.msra.mxu0 0
        %1132 = vmatprep.subr.bf16.mxu0 0
        %1133 = vmatpush1.bf16.msra.mxu0 0
        %1134 = vmatprep.mubr.bf16.mxu0 0
        %1135 = vmatmul.mubr.bf16.gmra.mrb[0].mxu0 %v971
        %v1136 = vpop.f32.mrb[0].mxu0
        %v1137 = vadd.f32 %v957, %v1136
        %v1138 = vpop.f32.mrb[0].mxu0
        %v1139 = vadd.f32 %v957, %v1138
        %v1140 = vpop.f32.mrb[0].mxu0
        %v1141 = vadd.f32 %v962, %v1140
        %v1142 = vpop.f32.mrb[0].mxu0
        %v1143 = vadd.f32 %v962, %v1142
        %1144 = vdwg.mxu0
        %v1145 = vmul.f32 %v1012, 0.5
        %v1146 = vmul.f32 %v1014, 0.5
        %v1147 = vmul.f32 %v1055, 0.5
        %v1148 = vmul.f32 %v1057, 0.5
        %v1149 = vmul.f32 %v1098, 0.5
        %v1150 = vmul.f32 %v1100, 0.5
        %v1151 = vmul.f32 %v1141, 0.5
        %v1152 = vmul.f32 %v1143, 0.5
        %v1153 = vmul.f32 %v1145, 1.442695
        %v1154 = vpow.pop %v1153
        %v1155 = vmul.f32 %v1146, 1.442695
        %v1156 = vpow.pop %v1155
        %v1157 = vmul.f32 %v1147, 1.442695
        %v1158 = vpow.pop %v1157
        %v1159 = vmul.f32 %v1148, 1.442695
        %v1160 = vpow.pop %v1159
        %v1161 = vmul.f32 %v1149, 1.442695
        %v1162 = vpow.pop %v1161
        %v1163 = vmul.f32 %v1150, 1.442695
        %v1164 = vpow.pop %v1163
        %v1165 = vmul.f32 %v1151, 1.442695
        %v1166 = vpow.pop %v1165
        %v1167 = vmul.f32 %v1152, 1.442695
        %v1168 = vpow.pop %v1167
        %v1169 = vld [vmem:[%s524] sm:$0xff]
        %v1170 = vld [vmem:[%s524 + $0x8] sm:$0xff]
        %v1171 = vld [vmem:[%s524 + $0x10] sm:$0xff]
        %v1172 = vld [vmem:[%s524 + $0x18] sm:$0xff]
        %v1173 = vunpack.c.l.bf16 %v1169
        %v1174 = vunpack.c.h.bf16 %v1169
        %v1175 = vunpack.c.l.bf16 %v1170
        %v1176 = vunpack.c.h.bf16 %v1170
        %v1177 = vunpack.c.l.bf16 %v1171
        %v1178 = vunpack.c.h.bf16 %v1171
        %v1179 = vunpack.c.l.bf16 %v1172
        %v1180 = vunpack.c.h.bf16 %v1172
        %v1181 = vmul.f32 %v1173, %v1154
        %v1182 = vmul.f32 %v1174, %v1156
        %v1183 = vmul.f32 %v1175, %v1158
        %v1184 = vmul.f32 %v1176, %v1160
        %v1185 = vmul.f32 %v1177, %v1162
        %v1186 = vmul.f32 %v1178, %v1164
        %v1187 = vmul.f32 %v1179, %v1166
        %v1188 = vmul.f32 %v1180, %v1168
        %v1189 = vadd.f32 %v1008, %v1181
        %v1190 = vadd.f32 %v1010, %v1182
        %v1191 = vadd.f32 %v1051, %v1183
        %v1192 = vadd.f32 %v1053, %v1184
        %v1193 = vadd.f32 %v1094, %v1185
        %v1194 = vadd.f32 %v1096, %v1186
        %v1195 = vadd.f32 %v1137, %v1187
        %v1196 = vadd.f32 %v1139, %v1188
        %v1197 = vld [vmem:[%s6] sm:$0xf]
        %v1198 = vld [vmem:[%s6 + $0x4] sm:$0xf]
        %v1199 = vld [vmem:[%s6 + $0x8] sm:$0xf]
        %v1200 = vld [vmem:[%s6 + $0xc] sm:$0xf]
        %v1201 = vpack.c.bf16 %v1189, %v1189
        %v1202 = vpack.c.bf16 %v1190, %v1190
        %v1203 = vpack.c.bf16 %v1191, %v1191
        %v1204 = vpack.c.bf16 %v1192, %v1192
        %v1205 = vpack.c.bf16 %v1193, %v1193
        %v1206 = vpack.c.bf16 %v1194, %v1194
        %v1207 = vpack.c.bf16 %v1195, %v1195
        %v1208 = vpack.c.bf16 %v1196, %v1196
        %v1209 = vld [vmem:[%s7] sm:$0xff]
        %v1210 = vld [vmem:[%s7 + $0x8] sm:$0xff]
        %v1211 = vld [vmem:[%s7 + $0x10] sm:$0xff]
        %v1212 = vld [vmem:[%s7 + $0x18] sm:$0xff]
        %1214 = vset.pattern.permute.xlu0 0
        %1215 = vperm.xlu0 %1214, %v1209
        %v1216 = vpop.permute.xlu0 %1215
        %1219 = vset.pattern.permute.xlu0 0
        %1220 = vperm.xlu0 %1219, %v1210
        %v1221 = vpop.permute.xlu0 %1220
        %1224 = vset.pattern.permute.xlu0 0
        %1225 = vperm.xlu0 %1224, %v1211
        %v1226 = vpop.permute.xlu0 %1225
        %1229 = vset.pattern.permute.xlu0 0
        %1230 = vperm.xlu0 %1229, %v1212
        %v1231 = vpop.permute.xlu0 %1230
        %v1237 = vunpack.c.l.b16 %v1197
        %v1238 = vunpack.c.l.b16 %v1198
        %v1239 = vunpack.c.l.b16 %v1199
        %v1240 = vunpack.c.l.b16 %v1200
        %v1241 = vpack.c.b16 %v1238, %v1237
        %v1242 = vpack.c.b16 %v1240, %v1239
        %vm1243 = vcmask 64512
        %v1245 = vsel %vm1243, %v1241, 0
        %v1248 = vsel %vm1243, %v1242, 0
        %vm1250 = vcmask 1043456
        %v1252 = vsel %vm1250, %v1201, 0
        %v1255 = vsel %vm1250, %v1202, 0
        %v1258 = vsel %vm1250, %v1203, 0
        %v1261 = vsel %vm1250, %v1204, 0
        %v1264 = vsel %vm1250, %v1205, 0
        %v1267 = vsel %vm1250, %v1206, 0
        %v1270 = vsel %vm1250, %v1207, 0
        %v1273 = vsel %vm1250, %v1208, 0
        %1275 = vmatprep.subr.bf16.mxu0 %v1255
        %1276 = vmatpush1.bf16.msra.mxu0 %v1252
        %1277 = vmatprep.subr.bf16.mxu0 0
        %1278 = vmatpush1.bf16.msra.mxu0 0
        %1279 = vmatprep.subr.bf16.mxu0 0
        %1280 = vmatpush1.bf16.msra.mxu0 0
        %1281 = vmatprep.subr.bf16.mxu0 0
        %1282 = vmatpush1.bf16.msra.mxu0 0
        %1283 = vmatprep.subr.bf16.mxu0 0
        %1284 = vmatpush1.bf16.msra.mxu0 0
        %1285 = vmatprep.subr.bf16.mxu0 0
        %1286 = vmatpush1.bf16.msra.mxu0 0
        %1287 = vmatprep.subr.bf16.mxu0 0
        %1288 = vmatpush1.bf16.msra.mxu0 0
        %1289 = vmatprep.subr.bf16.mxu0 0
        %1290 = vmatpush1.bf16.msra.mxu0 0
        %1291 = vmatprep.subr.bf16.mxu0 0
        %1292 = vmatpush1.bf16.msra.mxu0 0
        %1293 = vmatprep.subr.bf16.mxu0 0
        %1294 = vmatpush1.bf16.msra.mxu0 0
        %1295 = vmatprep.subr.bf16.mxu0 0
        %1296 = vmatpush1.bf16.msra.mxu0 0
        %1297 = vmatprep.subr.bf16.mxu0 0
        %1298 = vmatpush1.bf16.msra.mxu0 0
        %1299 = vmatprep.subr.bf16.mxu0 0
        %1300 = vmatpush1.bf16.msra.mxu0 0
        %1301 = vmatprep.subr.bf16.mxu0 0
        %1302 = vmatpush1.bf16.msra.mxu0 0
        %1303 = vmatprep.subr.bf16.mxu0 0
        %1304 = vmatpush1.bf16.msra.mxu0 0
        %1305 = vmatprep.subr.bf16.mxu0 0
        %1306 = vmatpush1.bf16.msra.mxu0 0
        %1307 = vmatprep.mubr.bf16.mxu0 0
        %1308 = vmatmul.mubr.bf16.gmra.mrb[0].mxu0 %v1245
        %v1309 = vpop.f32.mrb[0].mxu0
        %v1310 = vadd.f32 %v1216, %v1309
        %v1311 = vpop.f32.mrb[0].mxu0
        %v1312 = vadd.f32 %v1216, %v1311
        %v1313 = vpop.f32.mrb[0].mxu0
        %v1314 = vadd.f32 %v1221, %v1313
        %v1315 = vpop.f32.mrb[0].mxu0
        %v1316 = vadd.f32 %v1221, %v1315
        %1317 = vmatprep.mubr.bf16.mxu0 0
        %1318 = vmatmul.mubr.bf16.gmra.mrb[0].mxu0 %v1248
        %v1319 = vpop.f32.mrb[0].mxu0
        %v1320 = vadd.f32 %v1226, %v1319
        %v1321 = vpop.f32.mrb[0].mxu0
        %v1322 = vadd.f32 %v1226, %v1321
        %v1323 = vpop.f32.mrb[0].mxu0
        %v1324 = vadd.f32 %v1231, %v1323
        %v1325 = vpop.f32.mrb[0].mxu0
        %v1326 = vadd.f32 %v1231, %v1325
        %1327 = vdwg.mxu0
        %1328 = vmatprep.subr.bf16.mxu0 %v1261
        %1329 = vmatpush1.bf16.msra.mxu0 %v1258
        %1330 = vmatprep.subr.bf16.mxu0 0
        %1331 = vmatpush1.bf16.msra.mxu0 0
        %1332 = vmatprep.subr.bf16.mxu0 0
        %1333 = vmatpush1.bf16.msra.mxu0 0
        %1334 = vmatprep.subr.bf16.mxu0 0
        %1335 = vmatpush1.bf16.msra.mxu0 0
        %1336 = vmatprep.subr.bf16.mxu0 0
        %1337 = vmatpush1.bf16.msra.mxu0 0
        %1338 = vmatprep.subr.bf16.mxu0 0
        %1339 = vmatpush1.bf16.msra.mxu0 0
        %1340 = vmatprep.subr.bf16.mxu0 0
        %1341 = vmatpush1.bf16.msra.mxu0 0
        %1342 = vmatprep.subr.bf16.mxu0 0
        %1343 = vmatpush1.bf16.msra.mxu0 0
        %1344 = vmatprep.subr.bf16.mxu0 0
        %1345 = vmatpush1.bf16.msra.mxu0 0
        %1346 = vmatprep.subr.bf16.mxu0 0
        %1347 = vmatpush1.bf16.msra.mxu0 0
        %1348 = vmatprep.subr.bf16.mxu0 0
        %1349 = vmatpush1.bf16.msra.mxu0 0
        %1350 = vmatprep.subr.bf16.mxu0 0
        %1351 = vmatpush1.bf16.msra.mxu0 0
        %1352 = vmatprep.subr.bf16.mxu0 0
        %1353 = vmatpush1.bf16.msra.mxu0 0
        %1354 = vmatprep.subr.bf16.mxu0 0
        %1355 = vmatpush1.bf16.msra.mxu0 0
        %1356 = vmatprep.subr.bf16.mxu0 0
        %1357 = vmatpush1.bf16.msra.mxu0 0
        %1358 = vmatprep.subr.bf16.mxu0 0
        %1359 = vmatpush1.bf16.msra.mxu0 0
        %1360 = vmatprep.mubr.bf16.mxu0 0
        %1361 = vmatmul.mubr.bf16.gmra.mrb[0].mxu0 %v1245
        %v1362 = vpop.f32.mrb[0].mxu0
        %v1363 = vadd.f32 %v1216, %v1362
        %v1364 = vpop.f32.mrb[0].mxu0
        %v1365 = vadd.f32 %v1216, %v1364
        %v1366 = vpop.f32.mrb[0].mxu0
        %v1367 = vadd.f32 %v1221, %v1366
        %v1368 = vpop.f32.mrb[0].mxu0
        %v1369 = vadd.f32 %v1221, %v1368
        %1370 = vmatprep.mubr.bf16.mxu0 0
        %1371 = vmatmul.mubr.bf16.gmra.mrb[0].mxu0 %v1248
        %v1372 = vpop.f32.mrb[0].mxu0
        %v1373 = vadd.f32 %v1226, %v1372
        %v1374 = vpop.f32.mrb[0].mxu0
        %v1375 = vadd.f32 %v1226, %v1374
        %v1376 = vpop.f32.mrb[0].mxu0
        %v1377 = vadd.f32 %v1231, %v1376
        %v1378 = vpop.f32.mrb[0].mxu0
        %v1379 = vadd.f32 %v1231, %v1378
        %1380 = vdwg.mxu0
        %1381 = vmatprep.subr.bf16.mxu0 %v1267
        %1382 = vmatpush1.bf16.msra.mxu0 %v1264
        %1383 = vmatprep.subr.bf16.mxu0 0
        %1384 = vmatpush1.bf16.msra.mxu0 0
        %1385 = vmatprep.subr.bf16.mxu0 0
        %1386 = vmatpush1.bf16.msra.mxu0 0
        %1387 = vmatprep.subr.bf16.mxu0 0
        %1388 = vmatpush1.bf16.msra.mxu0 0
        %1389 = vmatprep.subr.bf16.mxu0 0
        %1390 = vmatpush1.bf16.msra.mxu0 0
        %1391 = vmatprep.subr.bf16.mxu0 0
        %1392 = vmatpush1.bf16.msra.mxu0 0
        %1393 = vmatprep.subr.bf16.mxu0 0
        %1394 = vmatpush1.bf16.msra.mxu0 0
        %1395 = vmatprep.subr.bf16.mxu0 0
        %1396 = vmatpush1.bf16.msra.mxu0 0
        %1397 = vmatprep.subr.bf16.mxu0 0
        %1398 = vmatpush1.bf16.msra.mxu0 0
        %1399 = vmatprep.subr.bf16.mxu0 0
        %1400 = vmatpush1.bf16.msra.mxu0 0
        %1401 = vmatprep.subr.bf16.mxu0 0
        %1402 = vmatpush1.bf16.msra.mxu0 0
        %1403 = vmatprep.subr.bf16.mxu0 0
        %1404 = vmatpush1.bf16.msra.mxu0 0
        %1405 = vmatprep.subr.bf16.mxu0 0
        %1406 = vmatpush1.bf16.msra.mxu0 0
        %1407 = vmatprep.subr.bf16.mxu0 0
        %1408 = vmatpush1.bf16.msra.mxu0 0
        %1409 = vmatprep.subr.bf16.mxu0 0
        %1410 = vmatpush1.bf16.msra.mxu0 0
        %1411 = vmatprep.subr.bf16.mxu0 0
        %1412 = vmatpush1.bf16.msra.mxu0 0
        %1413 = vmatprep.mubr.bf16.mxu0 0
        %1414 = vmatmul.mubr.bf16.gmra.mrb[0].mxu0 %v1245
        %v1415 = vpop.f32.mrb[0].mxu0
        %v1416 = vadd.f32 %v1216, %v1415
        %v1417 = vpop.f32.mrb[0].mxu0
        %v1418 = vadd.f32 %v1216, %v1417
        %v1419 = vpop.f32.mrb[0].mxu0
        %v1420 = vadd.f32 %v1221, %v1419
        %v1421 = vpop.f32.mrb[0].mxu0
        %v1422 = vadd.f32 %v1221, %v1421
        %1423 = vmatprep.mubr.bf16.mxu0 0
        %1424 = vmatmul.mubr.bf16.gmra.mrb[0].mxu0 %v1248
        %v1425 = vpop.f32.mrb[0].mxu0
        %v1426 = vadd.f32 %v1226, %v1425
        %v1427 = vpop.f32.mrb[0].mxu0
        %v1428 = vadd.f32 %v1226, %v1427
        %v1429 = vpop.f32.mrb[0].mxu0
        %v1430 = vadd.f32 %v1231, %v1429
        %v1431 = vpop.f32.mrb[0].mxu0
        %v1432 = vadd.f32 %v1231, %v1431
        %1433 = vdwg.mxu0
        %1434 = vmatprep.subr.bf16.mxu0 %v1273
        %1435 = vmatpush1.bf16.msra.mxu0 %v1270
        %1436 = vmatprep.subr.bf16.mxu0 0
        %1437 = vmatpush1.bf16.msra.mxu0 0
        %1438 = vmatprep.subr.bf16.mxu0 0
        %1439 = vmatpush1.bf16.msra.mxu0 0
        %1440 = vmatprep.subr.bf16.mxu0 0
        %1441 = vmatpush1.bf16.msra.mxu0 0
        %1442 = vmatprep.subr.bf16.mxu0 0
        %1443 = vmatpush1.bf16.msra.mxu0 0
        %1444 = vmatprep.subr.bf16.mxu0 0
        %1445 = vmatpush1.bf16.msra.mxu0 0
        %1446 = vmatprep.subr.bf16.mxu0 0
        %1447 = vmatpush1.bf16.msra.mxu0 0
        %1448 = vmatprep.subr.bf16.mxu0 0
        %1449 = vmatpush1.bf16.msra.mxu0 0
        %1450 = vmatprep.subr.bf16.mxu0 0
        %1451 = vmatpush1.bf16.msra.mxu0 0
        %1452 = vmatprep.subr.bf16.mxu0 0
        %1453 = vmatpush1.bf16.msra.mxu0 0
        %1454 = vmatprep.subr.bf16.mxu0 0
        %1455 = vmatpush1.bf16.msra.mxu0 0
        %1456 = vmatprep.subr.bf16.mxu0 0
        %1457 = vmatpush1.bf16.msra.mxu0 0
        %1458 = vmatprep.subr.bf16.mxu0 0
        %1459 = vmatpush1.bf16.msra.mxu0 0
        %1460 = vmatprep.subr.bf16.mxu0 0
        %1461 = vmatpush1.bf16.msra.mxu0 0
        %1462 = vmatprep.subr.bf16.mxu0 0
        %1463 = vmatpush1.bf16.msra.mxu0 0
        %1464 = vmatprep.subr.bf16.mxu0 0
        %1465 = vmatpush1.bf16.msra.mxu0 0
        %1466 = vmatprep.mubr.bf16.mxu0 0
        %1467 = vmatmul.mubr.bf16.gmra.mrb[0].mxu0 %v1245
        %v1468 = vpop.f32.mrb[0].mxu0
        %v1469 = vadd.f32 %v1216, %v1468
        %v1470 = vpop.f32.mrb[0].mxu0
        %v1471 = vadd.f32 %v1216, %v1470
        %v1472 = vpop.f32.mrb[0].mxu0
        %v1473 = vadd.f32 %v1221, %v1472
        %v1474 = vpop.f32.mrb[0].mxu0
        %v1475 = vadd.f32 %v1221, %v1474
        %1476 = vmatprep.mubr.bf16.mxu0 0
        %1477 = vmatmul.mubr.bf16.gmra.mrb[0].mxu0 %v1248
        %v1478 = vpop.f32.mrb[0].mxu0
        %v1479 = vadd.f32 %v1226, %v1478
        %v1480 = vpop.f32.mrb[0].mxu0
        %v1481 = vadd.f32 %v1226, %v1480
        %v1482 = vpop.f32.mrb[0].mxu0
        %v1483 = vadd.f32 %v1231, %v1482
        %v1484 = vpop.f32.mrb[0].mxu0
        %v1485 = vadd.f32 %v1231, %v1484
        %1486 = vdwg.mxu0
        %v1487 = vmax.f32 %v1310, 0.0
        %v1488 = vmax.f32 %v1312, 0.0
        %v1489 = vmax.f32 %v1363, 0.0
        %v1490 = vmax.f32 %v1365, 0.0
        %v1491 = vmax.f32 %v1416, 0.0
        %v1492 = vmax.f32 %v1418, 0.0
        %v1493 = vmax.f32 %v1469, 0.0
        %v1494 = vmax.f32 %v1471, 0.0
        %v1495 = vmax.f32 %v1314, 0.0
        %v1496 = vmax.f32 %v1316, 0.0
        %v1497 = vmax.f32 %v1367, 0.0
        %v1498 = vmax.f32 %v1369, 0.0
        %v1499 = vmax.f32 %v1420, 0.0
        %v1500 = vmax.f32 %v1422, 0.0
        %v1501 = vmax.f32 %v1473, 0.0
        %v1502 = vmax.f32 %v1475, 0.0
        %v1503 = vmax.f32 %v1320, 0.0
        %v1504 = vmax.f32 %v1322, 0.0
        %v1505 = vmax.f32 %v1373, 0.0
        %v1506 = vmax.f32 %v1375, 0.0
        %v1507 = vmax.f32 %v1426, 0.0
        %v1508 = vmax.f32 %v1428, 0.0
        %v1509 = vmax.f32 %v1479, 0.0
        %v1510 = vmax.f32 %v1481, 0.0
        %v1511 = vmax.f32 %v1324, 0.0
        %v1512 = vmax.f32 %v1326, 0.0
        %v1513 = vmax.f32 %v1377, 0.0
        %v1514 = vmax.f32 %v1379, 0.0
        %v1515 = vmax.f32 %v1430, 0.0
        %v1516 = vmax.f32 %v1432, 0.0
        %v1517 = vmax.f32 %v1483, 0.0
        %v1518 = vmax.f32 %v1485, 0.0
        %v1519 = vpack.c.bf16 %v1495, %v1487
        %v1520 = vpack.c.bf16 %v1496, %v1488
        %v1521 = vpack.c.bf16 %v1497, %v1489
        %v1522 = vpack.c.bf16 %v1498, %v1490
        %v1523 = vpack.c.bf16 %v1499, %v1491
        %v1524 = vpack.c.bf16 %v1500, %v1492
        %v1525 = vpack.c.bf16 %v1501, %v1493
        %v1526 = vpack.c.bf16 %v1502, %v1494
        %v1527 = vpack.c.bf16 %v1511, %v1503
        %v1528 = vpack.c.bf16 %v1512, %v1504
        %v1529 = vpack.c.bf16 %v1513, %v1505
        %v1530 = vpack.c.bf16 %v1514, %v1506
        %v1531 = vpack.c.bf16 %v1515, %v1507
        %v1532 = vpack.c.bf16 %v1516, %v1508
        %v1533 = vpack.c.bf16 %v1517, %v1509
        %v1534 = vpack.c.bf16 %v1518, %v1510
        %v1535 = vld [vmem:[%s8] sm:$0xf]
        %v1536 = vld [vmem:[%s8 + $0x4] sm:$0xf]
        %v1537 = vld [vmem:[%s9] sm:$0xff]
        %v1538 = vld [vmem:[%s9 + $0x8] sm:$0xff]
        %1540 = vset.pattern.permute.xlu0 0
        %1541 = vperm.xlu0 %1540, %v1537
        %v1542 = vpop.permute.xlu0 %1541
        %1545 = vset.pattern.permute.xlu0 0
        %1546 = vperm.xlu0 %1545, %v1538
        %v1547 = vpop.permute.xlu0 %1546
        %v1551 = vunpack.c.l.b16 %v1535
        %v1552 = vunpack.c.l.b16 %v1536
        %v1553 = vpack.c.b16 %v1552, %v1551
        %v1555 = vsel %vm969, %v1553, 0
        %1557 = vmatprep.subr.bf16.mxu0 %v1520
        %1558 = vmatpush1.bf16.msra.mxu0 %v1519
        %1559 = vmatprep.subr.bf16.mxu0 %v1528
        %1560 = vmatpush1.bf16.msra.mxu0 %v1527
        %1561 = vmatprep.subr.bf16.mxu0 0
        %1562 = vmatpush1.bf16.msra.mxu0 0
        %1563 = vmatprep.subr.bf16.mxu0 0
        %1564 = vmatpush1.bf16.msra.mxu0 0
        %1565 = vmatprep.subr.bf16.mxu0 0
        %1566 = vmatpush1.bf16.msra.mxu0 0
        %1567 = vmatprep.subr.bf16.mxu0 0
        %1568 = vmatpush1.bf16.msra.mxu0 0
        %1569 = vmatprep.subr.bf16.mxu0 0
        %1570 = vmatpush1.bf16.msra.mxu0 0
        %1571 = vmatprep.subr.bf16.mxu0 0
        %1572 = vmatpush1.bf16.msra.mxu0 0
        %1573 = vmatprep.subr.bf16.mxu0 0
        %1574 = vmatpush1.bf16.msra.mxu0 0
        %1575 = vmatprep.subr.bf16.mxu0 0
        %1576 = vmatpush1.bf16.msra.mxu0 0
        %1577 = vmatprep.subr.bf16.mxu0 0
        %1578 = vmatpush1.bf16.msra.mxu0 0
        %1579 = vmatprep.subr.bf16.mxu0 0
        %1580 = vmatpush1.bf16.msra.mxu0 0
        %1581 = vmatprep.subr.bf16.mxu0 0
        %1582 = vmatpush1.bf16.msra.mxu0 0
        %1583 = vmatprep.subr.bf16.mxu0 0
        %1584 = vmatpush1.bf16.msra.mxu0 0
        %1585 = vmatprep.subr.bf16.mxu0 0
        %1586 = vmatpush1.bf16.msra.mxu0 0
        %1587 = vmatprep.subr.bf16.mxu0 0
        %1588 = vmatpush1.bf16.msra.mxu0 0
        %1589 = vmatprep.mubr.bf16.mxu0 0
        %1590 = vmatmul.mubr.bf16.gmra.mrb[0].mxu0 %v1555
        %v1591 = vpop.f32.mrb[0].mxu0
        %v1592 = vadd.f32 %v1542, %v1591
        %v1593 = vpop.f32.mrb[0].mxu0
        %v1594 = vadd.f32 %v1542, %v1593
        %v1595 = vpop.f32.mrb[0].mxu0
        %v1596 = vadd.f32 %v1547, %v1595
        %v1597 = vpop.f32.mrb[0].mxu0
        %v1598 = vadd.f32 %v1547, %v1597
        %1599 = vdwg.mxu0
        %1600 = vmatprep.subr.bf16.mxu0 %v1522
        %1601 = vmatpush1.bf16.msra.mxu0 %v1521
        %1602 = vmatprep.subr.bf16.mxu0 %v1530
        %1603 = vmatpush1.bf16.msra.mxu0 %v1529
        %1604 = vmatprep.subr.bf16.mxu0 0
        %1605 = vmatpush1.bf16.msra.mxu0 0
        %1606 = vmatprep.subr.bf16.mxu0 0
        %1607 = vmatpush1.bf16.msra.mxu0 0
        %1608 = vmatprep.subr.bf16.mxu0 0
        %1609 = vmatpush1.bf16.msra.mxu0 0
        %1610 = vmatprep.subr.bf16.mxu0 0
        %1611 = vmatpush1.bf16.msra.mxu0 0
        %1612 = vmatprep.subr.bf16.mxu0 0
        %1613 = vmatpush1.bf16.msra.mxu0 0
        %1614 = vmatprep.subr.bf16.mxu0 0
        %1615 = vmatpush1.bf16.msra.mxu0 0
        %1616 = vmatprep.subr.bf16.mxu0 0
        %1617 = vmatpush1.bf16.msra.mxu0 0
        %1618 = vmatprep.subr.bf16.mxu0 0
        %1619 = vmatpush1.bf16.msra.mxu0 0
        %1620 = vmatprep.subr.bf16.mxu0 0
        %1621 = vmatpush1.bf16.msra.mxu0 0
        %1622 = vmatprep.subr.bf16.mxu0 0
        %1623 = vmatpush1.bf16.msra.mxu0 0
        %1624 = vmatprep.subr.bf16.mxu0 0
        %1625 = vmatpush1.bf16.msra.mxu0 0
        %1626 = vmatprep.subr.bf16.mxu0 0
        %1627 = vmatpush1.bf16.msra.mxu0 0
        %1628 = vmatprep.subr.bf16.mxu0 0
        %1629 = vmatpush1.bf16.msra.mxu0 0
        %1630 = vmatprep.subr.bf16.mxu0 0
        %1631 = vmatpush1.bf16.msra.mxu0 0
        %1632 = vmatprep.mubr.bf16.mxu0 0
        %1633 = vmatmul.mubr.bf16.gmra.mrb[0].mxu0 %v1555
        %v1634 = vpop.f32.mrb[0].mxu0
        %v1635 = vadd.f32 %v1542, %v1634
        %v1636 = vpop.f32.mrb[0].mxu0
        %v1637 = vadd.f32 %v1542, %v1636
        %v1638 = vpop.f32.mrb[0].mxu0
        %v1639 = vadd.f32 %v1547, %v1638
        %v1640 = vpop.f32.mrb[0].mxu0
        %v1641 = vadd.f32 %v1547, %v1640
        %1642 = vdwg.mxu0
        %1643 = vmatprep.subr.bf16.mxu0 %v1524
        %1644 = vmatpush1.bf16.msra.mxu0 %v1523
        %1645 = vmatprep.subr.bf16.mxu0 %v1532
        %1646 = vmatpush1.bf16.msra.mxu0 %v1531
        %1647 = vmatprep.subr.bf16.mxu0 0
        %1648 = vmatpush1.bf16.msra.mxu0 0
        %1649 = vmatprep.subr.bf16.mxu0 0
        %1650 = vmatpush1.bf16.msra.mxu0 0
        %1651 = vmatprep.subr.bf16.mxu0 0
        %1652 = vmatpush1.bf16.msra.mxu0 0
        %1653 = vmatprep.subr.bf16.mxu0 0
        %1654 = vmatpush1.bf16.msra.mxu0 0
        %1655 = vmatprep.subr.bf16.mxu0 0
        %1656 = vmatpush1.bf16.msra.mxu0 0
        %1657 = vmatprep.subr.bf16.mxu0 0
        %1658 = vmatpush1.bf16.msra.mxu0 0
        %1659 = vmatprep.subr.bf16.mxu0 0
        %1660 = vmatpush1.bf16.msra.mxu0 0
        %1661 = vmatprep.subr.bf16.mxu0 0
        %1662 = vmatpush1.bf16.msra.mxu0 0
        %1663 = vmatprep.subr.bf16.mxu0 0
        %1664 = vmatpush1.bf16.msra.mxu0 0
        %1665 = vmatprep.subr.bf16.mxu0 0
        %1666 = vmatpush1.bf16.msra.mxu0 0
        %1667 = vmatprep.subr.bf16.mxu0 0
        %1668 = vmatpush1.bf16.msra.mxu0 0
        %1669 = vmatprep.subr.bf16.mxu0 0
        %1670 = vmatpush1.bf16.msra.mxu0 0
        %1671 = vmatprep.subr.bf16.mxu0 0
        %1672 = vmatpush1.bf16.msra.mxu0 0
        %1673 = vmatprep.subr.bf16.mxu0 0
        %1674 = vmatpush1.bf16.msra.mxu0 0
        %1675 = vmatprep.mubr.bf16.mxu0 0
        %1676 = vmatmul.mubr.bf16.gmra.mrb[0].mxu0 %v1555
        %v1677 = vpop.f32.mrb[0].mxu0
        %v1678 = vadd.f32 %v1542, %v1677
        %v1679 = vpop.f32.mrb[0].mxu0
        %v1680 = vadd.f32 %v1542, %v1679
        %v1681 = vpop.f32.mrb[0].mxu0
        %v1682 = vadd.f32 %v1547, %v1681
        %v1683 = vpop.f32.mrb[0].mxu0
        %v1684 = vadd.f32 %v1547, %v1683
        %1685 = vdwg.mxu0
        %1686 = vmatprep.subr.bf16.mxu0 %v1526
        %1687 = vmatpush1.bf16.msra.mxu0 %v1525
        %1688 = vmatprep.subr.bf16.mxu0 %v1534
        %1689 = vmatpush1.bf16.msra.mxu0 %v1533
        %1690 = vmatprep.subr.bf16.mxu0 0
        %1691 = vmatpush1.bf16.msra.mxu0 0
        %1692 = vmatprep.subr.bf16.mxu0 0
        %1693 = vmatpush1.bf16.msra.mxu0 0
        %1694 = vmatprep.subr.bf16.mxu0 0
        %1695 = vmatpush1.bf16.msra.mxu0 0
        %1696 = vmatprep.subr.bf16.mxu0 0
        %1697 = vmatpush1.bf16.msra.mxu0 0
        %1698 = vmatprep.subr.bf16.mxu0 0
        %1699 = vmatpush1.bf16.msra.mxu0 0
        %1700 = vmatprep.subr.bf16.mxu0 0
        %1701 = vmatpush1.bf16.msra.mxu0 0
        %1702 = vmatprep.subr.bf16.mxu0 0
        %1703 = vmatpush1.bf16.msra.mxu0 0
        %1704 = vmatprep.subr.bf16.mxu0 0
        %1705 = vmatpush1.bf16.msra.mxu0 0
        %1706 = vmatprep.subr.bf16.mxu0 0
        %1707 = vmatpush1.bf16.msra.mxu0 0
        %1708 = vmatprep.subr.bf16.mxu0 0
        %1709 = vmatpush1.bf16.msra.mxu0 0
        %1710 = vmatprep.subr.bf16.mxu0 0
        %1711 = vmatpush1.bf16.msra.mxu0 0
        %1712 = vmatprep.subr.bf16.mxu0 0
        %1713 = vmatpush1.bf16.msra.mxu0 0
        %1714 = vmatprep.subr.bf16.mxu0 0
        %1715 = vmatpush1.bf16.msra.mxu0 0
        %1716 = vmatprep.subr.bf16.mxu0 0
        %1717 = vmatpush1.bf16.msra.mxu0 0
        %1718 = vmatprep.mubr.bf16.mxu0 0
        %1719 = vmatmul.mubr.bf16.gmra.mrb[0].mxu0 %v1555
        %v1720 = vpop.f32.mrb[0].mxu0
        %v1721 = vadd.f32 %v1542, %v1720
        %v1722 = vpop.f32.mrb[0].mxu0
        %v1723 = vadd.f32 %v1542, %v1722
        %v1724 = vpop.f32.mrb[0].mxu0
        %v1725 = vadd.f32 %v1547, %v1724
        %v1726 = vpop.f32.mrb[0].mxu0
        %v1727 = vadd.f32 %v1547, %v1726
        %1728 = vdwg.mxu0
        %v1729 = vpack.c.bf16 %v1596, %v1592
        %v1730 = vpack.c.bf16 %v1598, %v1594
        %v1731 = vpack.c.bf16 %v1639, %v1635
        %v1732 = vpack.c.bf16 %v1641, %v1637
        %v1733 = vpack.c.bf16 %v1682, %v1678
        %v1734 = vpack.c.bf16 %v1684, %v1680
        %v1735 = vpack.c.bf16 %v1725, %v1721
        %v1736 = vpack.c.bf16 %v1727, %v1723
        %v1745 = vunpack.c.l.b16 %v1729
        %v1746 = vunpack.c.l.b16 %v1730
        %v1747 = vunpack.c.l.b16 %v1731
        %v1748 = vunpack.c.l.b16 %v1732
        %v1749 = vunpack.c.l.b16 %v1733
        %v1750 = vunpack.c.l.b16 %v1734
        %v1751 = vunpack.c.l.b16 %v1735
        %v1752 = vunpack.c.l.b16 %v1736
        %v1753 = vunpack.c.h.b16 %v1729
        %v1754 = vunpack.c.h.b16 %v1730
        %v1755 = vunpack.c.h.b16 %v1731
        %v1756 = vunpack.c.h.b16 %v1732
        %v1757 = vunpack.c.h.b16 %v1733
        %v1758 = vunpack.c.h.b16 %v1734
        %v1759 = vunpack.c.h.b16 %v1735
        %v1760 = vunpack.c.h.b16 %v1736
        %v1761 = vpack.c.b16 %v1746, %v1745
        %v1762 = vpack.c.b16 %v1748, %v1747
        %v1763 = vpack.c.b16 %v1750, %v1749
        %v1764 = vpack.c.b16 %v1752, %v1751
        %v1765 = vpack.c.b16 %v1754, %v1753
        %v1766 = vpack.c.b16 %v1756, %v1755
        %v1767 = vpack.c.b16 %v1758, %v1757
        %v1768 = vpack.c.b16 %v1760, %v1759
        %1777 = vst [vmem:[%s568] sm:$0xff] %v1761
        %1778 = vst [vmem:[%s568 + $0x8] sm:$0xff] %v1762
        %1779 = vst [vmem:[%s568 + $0x10] sm:$0xff] %v1763
        %1780 = vst [vmem:[%s568 + $0x18] sm:$0xff] %v1764
        %1781 = vst [vmem:[%s568 + $0x20] sm:$0xff] %v1765
        %1782 = vst [vmem:[%s568 + $0x28] sm:$0xff] %v1766
        %1783 = vst [vmem:[%s568 + $0x30] sm:$0xff] %v1767
        %1784 = vst [vmem:[%s568 + $0x38] sm:$0xff] %v1768
        %v1785 = vpack.c.bf16 %v1008, %v1008
        %v1786 = vpack.c.bf16 %v1010, %v1010
        %v1787 = vpack.c.bf16 %v1051, %v1051
        %v1788 = vpack.c.bf16 %v1053, %v1053
        %v1789 = vpack.c.bf16 %v1094, %v1094
        %v1790 = vpack.c.bf16 %v1096, %v1096
        %v1791 = vpack.c.bf16 %v1137, %v1137
        %v1792 = vpack.c.bf16 %v1139, %v1139
        %v1801 = vunpack.c.l.b16 %v1785
        %v1802 = vunpack.c.l.b16 %v1786
        %v1803 = vunpack.c.l.b16 %v1787
        %v1804 = vunpack.c.l.b16 %v1788
        %v1805 = vunpack.c.l.b16 %v1789
        %v1806 = vunpack.c.l.b16 %v1790
        %v1807 = vunpack.c.l.b16 %v1791
        %v1808 = vunpack.c.l.b16 %v1792
        %v1809 = vpack.c.b16 %v1802, %v1801
        %v1810 = vpack.c.b16 %v1804, %v1803
        %v1811 = vpack.c.b16 %v1806, %v1805
        %v1812 = vpack.c.b16 %v1808, %v1807
        %1817 = vst [vmem:[%s575] sm:$0xff] %v1809
        %1818 = vst [vmem:[%s575 + $0x8] sm:$0xff] %v1810
        %1819 = vst [vmem:[%s575 + $0x10] sm:$0xff] %v1811
        %1820 = vst [vmem:[%s575 + $0x18] sm:$0xff] %v1812
        %v1821 = vpack.c.bf16 %v1012, %v1012
        %v1822 = vpack.c.bf16 %v1014, %v1014
        %v1823 = vpack.c.bf16 %v1055, %v1055
        %v1824 = vpack.c.bf16 %v1057, %v1057
        %v1825 = vpack.c.bf16 %v1098, %v1098
        %v1826 = vpack.c.bf16 %v1100, %v1100
        %v1827 = vpack.c.bf16 %v1141, %v1141
        %v1828 = vpack.c.bf16 %v1143, %v1143
        %v1837 = vunpack.c.l.b16 %v1821
        %v1838 = vunpack.c.l.b16 %v1822
        %v1839 = vunpack.c.l.b16 %v1823
        %v1840 = vunpack.c.l.b16 %v1824
        %v1841 = vunpack.c.l.b16 %v1825
        %v1842 = vunpack.c.l.b16 %v1826
        %v1843 = vunpack.c.l.b16 %v1827
        %v1844 = vunpack.c.l.b16 %v1828
        %v1845 = vpack.c.b16 %v1838, %v1837
        %v1846 = vpack.c.b16 %v1840, %v1839
        %v1847 = vpack.c.b16 %v1842, %v1841
        %v1848 = vpack.c.b16 %v1844, %v1843
        %1853 = vst [vmem:[%s582] sm:$0xff] %v1845
        %1854 = vst [vmem:[%s582 + $0x8] sm:$0xff] %v1846
        %1855 = vst [vmem:[%s582 + $0x10] sm:$0xff] %v1847
        %1856 = vst [vmem:[%s582 + $0x18] sm:$0xff] %v1848
        %v1857 = vmul.f32 %v1154, %v1154
        %v1858 = vmul.f32 %v1156, %v1156
        %v1859 = vmul.f32 %v1158, %v1158
        %v1860 = vmul.f32 %v1160, %v1160
        %v1861 = vmul.f32 %v1162, %v1162
        %v1862 = vmul.f32 %v1164, %v1164
        %v1863 = vmul.f32 %v1166, %v1166
        %v1864 = vmul.f32 %v1168, %v1168
        %v1865 = vld [vmem:[%s11] sm:$0xff]
        %1867 = vset.pattern.permute.xlu0 0
        %1868 = vperm.xlu0 %1867, %v1865
        %v1869 = vpop.permute.xlu0 %1868
        %v1871 = vmul.f32 %v1857, %v1869
        %v1872 = vmul.f32 %v1858, %v1869
        %v1873 = vmul.f32 %v1859, %v1869
        %v1874 = vmul.f32 %v1860, %v1869
        %v1875 = vmul.f32 %v1861, %v1869
        %v1876 = vmul.f32 %v1862, %v1869
        %v1877 = vmul.f32 %v1863, %v1869
        %v1878 = vmul.f32 %v1864, %v1869
        %v1879 = vrot.slane %v1871, 4
        %v1880 = vadd.f32 %v1871, %v1879
        %v1881 = vrot.slane %v1880, 2
        %v1882 = vadd.f32 %v1880, %v1881
        %v1883 = vrot.slane %v1882, 1
        %v1884 = vadd.f32 %v1882, %v1883
        %v1885 = vrot.slane %v1872, 4
        %v1886 = vadd.f32 %v1872, %v1885
        %v1887 = vrot.slane %v1886, 2
        %v1888 = vadd.f32 %v1886, %v1887
        %v1889 = vrot.slane %v1888, 1
        %v1890 = vadd.f32 %v1888, %v1889
        %v1891 = vrot.slane %v1873, 4
        %v1892 = vadd.f32 %v1873, %v1891
        %v1893 = vrot.slane %v1892, 2
        %v1894 = vadd.f32 %v1892, %v1893
        %v1895 = vrot.slane %v1894, 1
        %v1896 = vadd.f32 %v1894, %v1895
        %v1897 = vrot.slane %v1874, 4
        %v1898 = vadd.f32 %v1874, %v1897
        %v1899 = vrot.slane %v1898, 2
        %v1900 = vadd.f32 %v1898, %v1899
        %v1901 = vrot.slane %v1900, 1
        %v1902 = vadd.f32 %v1900, %v1901
        %v1903 = vrot.slane %v1875, 4
        %v1904 = vadd.f32 %v1875, %v1903
        %v1905 = vrot.slane %v1904, 2
        %v1906 = vadd.f32 %v1904, %v1905
        %v1907 = vrot.slane %v1906, 1
        %v1908 = vadd.f32 %v1906, %v1907
        %v1909 = vrot.slane %v1876, 4
        %v1910 = vadd.f32 %v1876, %v1909
        %v1911 = vrot.slane %v1910, 2
        %v1912 = vadd.f32 %v1910, %v1911
        %v1913 = vrot.slane %v1912, 1
        %v1914 = vadd.f32 %v1912, %v1913
        %v1915 = vrot.slane %v1877, 4
        %v1916 = vadd.f32 %v1877, %v1915
        %v1917 = vrot.slane %v1916, 2
        %v1918 = vadd.f32 %v1916, %v1917
        %v1919 = vrot.slane %v1918, 1
        %v1920 = vadd.f32 %v1918, %v1919
        %v1921 = vrot.slane %v1878, 4
        %v1922 = vadd.f32 %v1878, %v1921
        %v1923 = vrot.slane %v1922, 2
        %v1924 = vadd.f32 %v1922, %v1923
        %v1925 = vrot.slane %v1924, 1
        %v1926 = vadd.f32 %v1924, %v1925
        %v1927 = vld [vmem:[%s10] sm:$0xff]
        %v1929 = vsel %vm1243, %v1927, 0
        %1931 = vmatprep.subr.mxu0 %v1010
        %1932 = vmatpush1.msra.mxu0 %v1008
        %1933 = vmatprep.subr.mxu0 0.0
        %1934 = vmatpush1.msra.mxu0 0.0
        %1935 = vmatprep.subr.mxu0 0.0
        %1936 = vmatpush1.msra.mxu0 0.0
        %1937 = vmatprep.subr.mxu0 0.0
        %1938 = vmatpush1.msra.mxu0 0.0
        %1939 = vmatprep.subr.mxu0 0.0
        %1940 = vmatpush1.msra.mxu0 0.0
        %1941 = vmatprep.subr.mxu0 0.0
        %1942 = vmatpush1.msra.mxu0 0.0
        %1943 = vmatprep.subr.mxu0 0.0
        %1944 = vmatpush1.msra.mxu0 0.0
        %1945 = vmatprep.subr.mxu0 0.0
        %1946 = vmatpush1.msra.mxu0 0.0
        %1947 = vmatprep.subr.mxu0 0.0
        %1948 = vmatpush1.msra.mxu0 0.0
        %1949 = vmatprep.subr.mxu0 0.0
        %1950 = vmatpush1.msra.mxu0 0.0
        %1951 = vmatprep.subr.mxu0 0.0
        %1952 = vmatpush1.msra.mxu0 0.0
        %1953 = vmatprep.subr.mxu0 0.0
        %1954 = vmatpush1.msra.mxu0 0.0
        %1955 = vmatprep.subr.mxu0 0.0
        %1956 = vmatpush1.msra.mxu0 0.0
        %1957 = vmatprep.subr.mxu0 0.0
        %1958 = vmatpush1.msra.mxu0 0.0
        %1959 = vmatprep.subr.mxu0 0.0
        %1960 = vmatpush1.msra.mxu0 0.0
        %1961 = vmatprep.subr.mxu0 0.0
        %1962 = vmatpush1.msra.mxu0 0.0
        %1963 = vmatprep.subr.mxu0 0.0
        %1964 = vmatpush1.msra.mxu0 0.0
        %1965 = vmatprep.subr.mxu0 0.0
        %1966 = vmatpush1.msra.mxu0 0.0
        %1967 = vmatprep.subr.mxu0 0.0
        %1968 = vmatpush1.msra.mxu0 0.0
        %1969 = vmatprep.subr.mxu0 0.0
        %1970 = vmatpush1.msra.mxu0 0.0
        %1971 = vmatprep.subr.mxu0 0.0
        %1972 = vmatpush1.msra.mxu0 0.0
        %1973 = vmatprep.subr.mxu0 0.0
        %1974 = vmatpush1.msra.mxu0 0.0
        %1975 = vmatprep.subr.mxu0 0.0
        %1976 = vmatpush1.msra.mxu0 0.0
        %1977 = vmatprep.subr.mxu0 0.0
        %1978 = vmatpush1.msra.mxu0 0.0
        %1979 = vmatprep.subr.mxu0 0.0
        %1980 = vmatpush1.msra.mxu0 0.0
        %1981 = vmatprep.subr.mxu0 0.0
        %1982 = vmatpush1.msra.mxu0 0.0
        %1983 = vmatprep.subr.mxu0 0.0
        %1984 = vmatpush1.msra.mxu0 0.0
        %1985 = vmatprep.subr.mxu0 0.0
        %1986 = vmatpush1.msra.mxu0 0.0
        %1987 = vmatprep.subr.mxu0 0.0
        %1988 = vmatpush1.msra.mxu0 0.0
        %1989 = vmatprep.subr.mxu0 0.0
        %1990 = vmatpush1.msra.mxu0 0.0
        %1991 = vmatprep.subr.mxu0 0.0
        %1992 = vmatpush1.msra.mxu0 0.0
        %1993 = vmatprep.subr.mxu0 0.0
        %1994 = vmatpush1.msra.mxu0 0.0
        %1995 = vmatprep.mubr.f32.mxu0 0.0
        %1996 = vmatmul.mubr.f32.gmra.mrb[0].mxu0 %v1929
        %v1997 = vpop.f32.mrb[0].mxu0
        %v1998 = vadd.f32 0.0, %v1997
        %v1999 = vpop.f32.mrb[0].mxu0
        %v2000 = vadd.f32 0.0, %v1999
        %2001 = vdwg.mxu0
        %2002 = vmatprep.subr.mxu0 %v1053
        %2003 = vmatpush1.msra.mxu0 %v1051
        %2004 = vmatprep.subr.mxu0 0.0
        %2005 = vmatpush1.msra.mxu0 0.0
        %2006 = vmatprep.subr.mxu0 0.0
        %2007 = vmatpush1.msra.mxu0 0.0
        %2008 = vmatprep.subr.mxu0 0.0
        %2009 = vmatpush1.msra.mxu0 0.0
        %2010 = vmatprep.subr.mxu0 0.0
        %2011 = vmatpush1.msra.mxu0 0.0
        %2012 = vmatprep.subr.mxu0 0.0
        %2013 = vmatpush1.msra.mxu0 0.0
        %2014 = vmatprep.subr.mxu0 0.0
        %2015 = vmatpush1.msra.mxu0 0.0
        %2016 = vmatprep.subr.mxu0 0.0
        %2017 = vmatpush1.msra.mxu0 0.0
        %2018 = vmatprep.subr.mxu0 0.0
        %2019 = vmatpush1.msra.mxu0 0.0
        %2020 = vmatprep.subr.mxu0 0.0
        %2021 = vmatpush1.msra.mxu0 0.0
        %2022 = vmatprep.subr.mxu0 0.0
        %2023 = vmatpush1.msra.mxu0 0.0
        %2024 = vmatprep.subr.mxu0 0.0
        %2025 = vmatpush1.msra.mxu0 0.0
        %2026 = vmatprep.subr.mxu0 0.0
        %2027 = vmatpush1.msra.mxu0 0.0
        %2028 = vmatprep.subr.mxu0 0.0
        %2029 = vmatpush1.msra.mxu0 0.0
        %2030 = vmatprep.subr.mxu0 0.0
        %2031 = vmatpush1.msra.mxu0 0.0
        %2032 = vmatprep.subr.mxu0 0.0
        %2033 = vmatpush1.msra.mxu0 0.0
        %2034 = vmatprep.subr.mxu0 0.0
        %2035 = vmatpush1.msra.mxu0 0.0
        %2036 = vmatprep.subr.mxu0 0.0
        %2037 = vmatpush1.msra.mxu0 0.0
        %2038 = vmatprep.subr.mxu0 0.0
        %2039 = vmatpush1.msra.mxu0 0.0
        %2040 = vmatprep.subr.mxu0 0.0
        %2041 = vmatpush1.msra.mxu0 0.0
        %2042 = vmatprep.subr.mxu0 0.0
        %2043 = vmatpush1.msra.mxu0 0.0
        %2044 = vmatprep.subr.mxu0 0.0
        %2045 = vmatpush1.msra.mxu0 0.0
        %2046 = vmatprep.subr.mxu0 0.0
        %2047 = vmatpush1.msra.mxu0 0.0
        %2048 = vmatprep.subr.mxu0 0.0
        %2049 = vmatpush1.msra.mxu0 0.0
        %2050 = vmatprep.subr.mxu0 0.0
        %2051 = vmatpush1.msra.mxu0 0.0
        %2052 = vmatprep.subr.mxu0 0.0
        %2053 = vmatpush1.msra.mxu0 0.0
        %2054 = vmatprep.subr.mxu0 0.0
        %2055 = vmatpush1.msra.mxu0 0.0
        %2056 = vmatprep.subr.mxu0 0.0
        %2057 = vmatpush1.msra.mxu0 0.0
        %2058 = vmatprep.subr.mxu0 0.0
        %2059 = vmatpush1.msra.mxu0 0.0
        %2060 = vmatprep.subr.mxu0 0.0
        %2061 = vmatpush1.msra.mxu0 0.0
        %2062 = vmatprep.subr.mxu0 0.0
        %2063 = vmatpush1.msra.mxu0 0.0
        %2064 = vmatprep.subr.mxu0 0.0
        %2065 = vmatpush1.msra.mxu0 0.0
        %2066 = vmatprep.mubr.f32.mxu0 0.0
        %2067 = vmatmul.mubr.f32.gmra.mrb[0].mxu0 %v1929
        %v2068 = vpop.f32.mrb[0].mxu0
        %v2069 = vadd.f32 0.0, %v2068
        %v2070 = vpop.f32.mrb[0].mxu0
        %v2071 = vadd.f32 0.0, %v2070
        %2072 = vdwg.mxu0
        %2073 = vmatprep.subr.mxu0 %v1096
        %2074 = vmatpush1.msra.mxu0 %v1094
        %2075 = vmatprep.subr.mxu0 0.0
        %2076 = vmatpush1.msra.mxu0 0.0
        %2077 = vmatprep.subr.mxu0 0.0
        %2078 = vmatpush1.msra.mxu0 0.0
        %2079 = vmatprep.subr.mxu0 0.0
        %2080 = vmatpush1.msra.mxu0 0.0
        %2081 = vmatprep.subr.mxu0 0.0
        %2082 = vmatpush1.msra.mxu0 0.0
        %2083 = vmatprep.subr.mxu0 0.0
        %2084 = vmatpush1.msra.mxu0 0.0
        %2085 = vmatprep.subr.mxu0 0.0
        %2086 = vmatpush1.msra.mxu0 0.0
        %2087 = vmatprep.subr.mxu0 0.0
        %2088 = vmatpush1.msra.mxu0 0.0
        %2089 = vmatprep.subr.mxu0 0.0
        %2090 = vmatpush1.msra.mxu0 0.0
        %2091 = vmatprep.subr.mxu0 0.0
        %2092 = vmatpush1.msra.mxu0 0.0
        %2093 = vmatprep.subr.mxu0 0.0
        %2094 = vmatpush1.msra.mxu0 0.0
        %2095 = vmatprep.subr.mxu0 0.0
        %2096 = vmatpush1.msra.mxu0 0.0
        %2097 = vmatprep.subr.mxu0 0.0
        %2098 = vmatpush1.msra.mxu0 0.0
        %2099 = vmatprep.subr.mxu0 0.0
        %2100 = vmatpush1.msra.mxu0 0.0
        %2101 = vmatprep.subr.mxu0 0.0
        %2102 = vmatpush1.msra.mxu0 0.0
        %2103 = vmatprep.subr.mxu0 0.0
        %2104 = vmatpush1.msra.mxu0 0.0
        %2105 = vmatprep.subr.mxu0 0.0
        %2106 = vmatpush1.msra.mxu0 0.0
        %2107 = vmatprep.subr.mxu0 0.0
        %2108 = vmatpush1.msra.mxu0 0.0
        %2109 = vmatprep.subr.mxu0 0.0
        %2110 = vmatpush1.msra.mxu0 0.0
        %2111 = vmatprep.subr.mxu0 0.0
        %2112 = vmatpush1.msra.mxu0 0.0
        %2113 = vmatprep.subr.mxu0 0.0
        %2114 = vmatpush1.msra.mxu0 0.0
        %2115 = vmatprep.subr.mxu0 0.0
        %2116 = vmatpush1.msra.mxu0 0.0
        %2117 = vmatprep.subr.mxu0 0.0
        %2118 = vmatpush1.msra.mxu0 0.0
        %2119 = vmatprep.subr.mxu0 0.0
        %2120 = vmatpush1.msra.mxu0 0.0
        %2121 = vmatprep.subr.mxu0 0.0
        %2122 = vmatpush1.msra.mxu0 0.0
        %2123 = vmatprep.subr.mxu0 0.0
        %2124 = vmatpush1.msra.mxu0 0.0
        %2125 = vmatprep.subr.mxu0 0.0
        %2126 = vmatpush1.msra.mxu0 0.0
        %2127 = vmatprep.subr.mxu0 0.0
        %2128 = vmatpush1.msra.mxu0 0.0
        %2129 = vmatprep.subr.mxu0 0.0
        %2130 = vmatpush1.msra.mxu0 0.0
        %2131 = vmatprep.subr.mxu0 0.0
        %2132 = vmatpush1.msra.mxu0 0.0
        %2133 = vmatprep.subr.mxu0 0.0
        %2134 = vmatpush1.msra.mxu0 0.0
        %2135 = vmatprep.subr.mxu0 0.0
        %2136 = vmatpush1.msra.mxu0 0.0
        %2137 = vmatprep.mubr.f32.mxu0 0.0
        %2138 = vmatmul.mubr.f32.gmra.mrb[0].mxu0 %v1929
        %v2139 = vpop.f32.mrb[0].mxu0
        %v2140 = vadd.f32 0.0, %v2139
        %v2141 = vpop.f32.mrb[0].mxu0
        %v2142 = vadd.f32 0.0, %v2141
        %2143 = vdwg.mxu0
        %2144 = vmatprep.subr.mxu0 %v1139
        %2145 = vmatpush1.msra.mxu0 %v1137
        %2146 = vmatprep.subr.mxu0 0.0
        %2147 = vmatpush1.msra.mxu0 0.0
        %2148 = vmatprep.subr.mxu0 0.0
        %2149 = vmatpush1.msra.mxu0 0.0
        %2150 = vmatprep.subr.mxu0 0.0
        %2151 = vmatpush1.msra.mxu0 0.0
        %2152 = vmatprep.subr.mxu0 0.0
        %2153 = vmatpush1.msra.mxu0 0.0
        %2154 = vmatprep.subr.mxu0 0.0
        %2155 = vmatpush1.msra.mxu0 0.0
        %2156 = vmatprep.subr.mxu0 0.0
        %2157 = vmatpush1.msra.mxu0 0.0
        %2158 = vmatprep.subr.mxu0 0.0
        %2159 = vmatpush1.msra.mxu0 0.0
        %2160 = vmatprep.subr.mxu0 0.0
        %2161 = vmatpush1.msra.mxu0 0.0
        %2162 = vmatprep.subr.mxu0 0.0
        %2163 = vmatpush1.msra.mxu0 0.0
        %2164 = vmatprep.subr.mxu0 0.0
        %2165 = vmatpush1.msra.mxu0 0.0
        %2166 = vmatprep.subr.mxu0 0.0
        %2167 = vmatpush1.msra.mxu0 0.0
        %2168 = vmatprep.subr.mxu0 0.0
        %2169 = vmatpush1.msra.mxu0 0.0
        %2170 = vmatprep.subr.mxu0 0.0
        %2171 = vmatpush1.msra.mxu0 0.0
        %2172 = vmatprep.subr.mxu0 0.0
        %2173 = vmatpush1.msra.mxu0 0.0
        %2174 = vmatprep.subr.mxu0 0.0
        %2175 = vmatpush1.msra.mxu0 0.0
        %2176 = vmatprep.subr.mxu0 0.0
        %2177 = vmatpush1.msra.mxu0 0.0
        %2178 = vmatprep.subr.mxu0 0.0
        %2179 = vmatpush1.msra.mxu0 0.0
        %2180 = vmatprep.subr.mxu0 0.0
        %2181 = vmatpush1.msra.mxu0 0.0
        %2182 = vmatprep.subr.mxu0 0.0
        %2183 = vmatpush1.msra.mxu0 0.0
        %2184 = vmatprep.subr.mxu0 0.0
        %2185 = vmatpush1.msra.mxu0 0.0
        %2186 = vmatprep.subr.mxu0 0.0
        %2187 = vmatpush1.msra.mxu0 0.0
        %2188 = vmatprep.subr.mxu0 0.0
        %2189 = vmatpush1.msra.mxu0 0.0
        %2190 = vmatprep.subr.mxu0 0.0
        %2191 = vmatpush1.msra.mxu0 0.0
        %2192 = vmatprep.subr.mxu0 0.0
        %2193 = vmatpush1.msra.mxu0 0.0
        %2194 = vmatprep.subr.mxu0 0.0
        %2195 = vmatpush1.msra.mxu0 0.0
        %2196 = vmatprep.subr.mxu0 0.0
        %2197 = vmatpush1.msra.mxu0 0.0
        %2198 = vmatprep.subr.mxu0 0.0
        %2199 = vmatpush1.msra.mxu0 0.0
        %2200 = vmatprep.subr.mxu0 0.0
        %2201 = vmatpush1.msra.mxu0 0.0
        %2202 = vmatprep.subr.mxu0 0.0
        %2203 = vmatpush1.msra.mxu0 0.0
        %2204 = vmatprep.subr.mxu0 0.0
        %2205 = vmatpush1.msra.mxu0 0.0
        %2206 = vmatprep.subr.mxu0 0.0
        %2207 = vmatpush1.msra.mxu0 0.0
        %2208 = vmatprep.mubr.f32.mxu0 0.0
        %2209 = vmatmul.mubr.f32.gmra.mrb[0].mxu0 %v1929
        %v2210 = vpop.f32.mrb[0].mxu0
        %v2211 = vadd.f32 0.0, %v2210
        %v2212 = vpop.f32.mrb[0].mxu0
        %v2213 = vadd.f32 0.0, %v2212
        %2214 = vdwg.mxu0
        %v2215 = vmul.f32 %v1998, %v1008
        %v2216 = vmul.f32 %v2000, %v1010
        %v2217 = vmul.f32 %v2069, %v1051
        %v2218 = vmul.f32 %v2071, %v1053
        %v2219 = vmul.f32 %v2140, %v1094
        %v2220 = vmul.f32 %v2142, %v1096
        %v2221 = vmul.f32 %v2211, %v1137
        %v2222 = vmul.f32 %v2213, %v1139
        %v2223 = vrot.slane %v2215, 4
        %v2224 = vadd.f32 %v2215, %v2223
        %v2225 = vrot.slane %v2224, 2
        %v2226 = vadd.f32 %v2224, %v2225
        %v2227 = vrot.slane %v2226, 1
        %v2228 = vadd.f32 %v2226, %v2227
        %v2229 = vrot.slane %v2216, 4
        %v2230 = vadd.f32 %v2216, %v2229
        %v2231 = vrot.slane %v2230, 2
        %v2232 = vadd.f32 %v2230, %v2231
        %v2233 = vrot.slane %v2232, 1
        %v2234 = vadd.f32 %v2232, %v2233
        %v2235 = vrot.slane %v2217, 4
        %v2236 = vadd.f32 %v2217, %v2235
        %v2237 = vrot.slane %v2236, 2
        %v2238 = vadd.f32 %v2236, %v2237
        %v2239 = vrot.slane %v2238, 1
        %v2240 = vadd.f32 %v2238, %v2239
        %v2241 = vrot.slane %v2218, 4
        %v2242 = vadd.f32 %v2218, %v2241
        %v2243 = vrot.slane %v2242, 2
        %v2244 = vadd.f32 %v2242, %v2243
        %v2245 = vrot.slane %v2244, 1
        %v2246 = vadd.f32 %v2244, %v2245
        %v2247 = vrot.slane %v2219, 4
        %v2248 = vadd.f32 %v2219, %v2247
        %v2249 = vrot.slane %v2248, 2
        %v2250 = vadd.f32 %v2248, %v2249
        %v2251 = vrot.slane %v2250, 1
        %v2252 = vadd.f32 %v2250, %v2251
        %v2253 = vrot.slane %v2220, 4
        %v2254 = vadd.f32 %v2220, %v2253
        %v2255 = vrot.slane %v2254, 2
        %v2256 = vadd.f32 %v2254, %v2255
        %v2257 = vrot.slane %v2256, 1
        %v2258 = vadd.f32 %v2256, %v2257
        %v2259 = vrot.slane %v2221, 4
        %v2260 = vadd.f32 %v2221, %v2259
        %v2261 = vrot.slane %v2260, 2
        %v2262 = vadd.f32 %v2260, %v2261
        %v2263 = vrot.slane %v2262, 1
        %v2264 = vadd.f32 %v2262, %v2263
        %v2265 = vrot.slane %v2222, 4
        %v2266 = vadd.f32 %v2222, %v2265
        %v2267 = vrot.slane %v2266, 2
        %v2268 = vadd.f32 %v2266, %v2267
        %v2269 = vrot.slane %v2268, 1
        %v2270 = vadd.f32 %v2268, %v2269
        %v2271 = vrot.slane %v1012, 4
        %v2272 = vadd.f32 %v1012, %v2271
        %v2273 = vrot.slane %v2272, 2
        %v2274 = vadd.f32 %v2272, %v2273
        %v2275 = vrot.slane %v2274, 1
        %v2276 = vadd.f32 %v2274, %v2275
        %v2277 = vrot.slane %v1014, 4
        %v2278 = vadd.f32 %v1014, %v2277
        %v2279 = vrot.slane %v2278, 2
        %v2280 = vadd.f32 %v2278, %v2279
        %v2281 = vrot.slane %v2280, 1
        %v2282 = vadd.f32 %v2280, %v2281
        %v2283 = vrot.slane %v1055, 4
        %v2284 = vadd.f32 %v1055, %v2283
        %v2285 = vrot.slane %v2284, 2
        %v2286 = vadd.f32 %v2284, %v2285
        %v2287 = vrot.slane %v2286, 1
        %v2288 = vadd.f32 %v2286, %v2287
        %v2289 = vrot.slane %v1057, 4
        %v2290 = vadd.f32 %v1057, %v2289
        %v2291 = vrot.slane %v2290, 2
        %v2292 = vadd.f32 %v2290, %v2291
        %v2293 = vrot.slane %v2292, 1
        %v2294 = vadd.f32 %v2292, %v2293
        %v2295 = vrot.slane %v1098, 4
        %v2296 = vadd.f32 %v1098, %v2295
        %v2297 = vrot.slane %v2296, 2
        %v2298 = vadd.f32 %v2296, %v2297
        %v2299 = vrot.slane %v2298, 1
        %v2300 = vadd.f32 %v2298, %v2299
        %v2301 = vrot.slane %v1100, 4
        %v2302 = vadd.f32 %v1100, %v2301
        %v2303 = vrot.slane %v2302, 2
        %v2304 = vadd.f32 %v2302, %v2303
        %v2305 = vrot.slane %v2304, 1
        %v2306 = vadd.f32 %v2304, %v2305
        %v2307 = vrot.slane %v1141, 4
        %v2308 = vadd.f32 %v1141, %v2307
        %v2309 = vrot.slane %v2308, 2
        %v2310 = vadd.f32 %v2308, %v2309
        %v2311 = vrot.slane %v2310, 1
        %v2312 = vadd.f32 %v2310, %v2311
        %v2313 = vrot.slane %v1143, 4
        %v2314 = vadd.f32 %v1143, %v2313
        %v2315 = vrot.slane %v2314, 2
        %v2316 = vadd.f32 %v2314, %v2315
        %v2317 = vrot.slane %v2316, 1
        %v2318 = vadd.f32 %v2316, %v2317
        %v2319 = vadd.f32 %v1884, %v2228
        %v2320 = vadd.f32 %v1890, %v2234
        %v2321 = vadd.f32 %v1896, %v2240
        %v2322 = vadd.f32 %v1902, %v2246
        %v2323 = vadd.f32 %v1908, %v2252
        %v2324 = vadd.f32 %v1914, %v2258
        %v2325 = vadd.f32 %v1920, %v2264
        %v2326 = vadd.f32 %v1926, %v2270
        %v2327 = vsub.f32 %v2319, %v2276
        %v2328 = vsub.f32 %v2320, %v2282
        %v2329 = vsub.f32 %v2321, %v2288
        %v2330 = vsub.f32 %v2322, %v2294
        %v2331 = vsub.f32 %v2323, %v2300
        %v2332 = vsub.f32 %v2324, %v2306
        %v2333 = vsub.f32 %v2325, %v2312
        %v2334 = vsub.f32 %v2326, %v2318
        %v2335 = vmul.f32 %v2327, 0.5
        %v2336 = vmul.f32 %v2328, 0.5
        %v2337 = vmul.f32 %v2329, 0.5
        %v2338 = vmul.f32 %v2330, 0.5
        %v2339 = vmul.f32 %v2331, 0.5
        %v2340 = vmul.f32 %v2332, 0.5
        %v2341 = vmul.f32 %v2333, 0.5
        %v2342 = vmul.f32 %v2334, 0.5
        %s2343 = smul.u32 %s36, 1024
        %v2344 = vlaneseq
        %v2345 = vand.u32 %v2344, 127
        %v2346 = vadd.s32 %v2345, 128
        %v2347 = vadd.s32 %v2345, 256
        %v2348 = vadd.s32 %v2345, 384
        %v2349 = vadd.s32 %v2345, 512
        %v2350 = vadd.s32 %v2345, 640
        %v2351 = vadd.s32 %v2345, 768
        %v2352 = vadd.s32 %v2345, 896
        %v2353 = vstv %s2343
        %v2354 = vadd.s32 %v2353, %v2345
        %v2355 = vadd.s32 %v2353, %v2346
        %v2356 = vadd.s32 %v2353, %v2347
        %v2357 = vadd.s32 %v2353, %v2348
        %v2358 = vadd.s32 %v2353, %v2349
        %v2359 = vadd.s32 %v2353, %v2350
        %v2360 = vadd.s32 %v2353, %v2351
        %v2361 = vadd.s32 %v2353, %v2352
        %vm2362 = vcmp.lt.s32.totalorder %v2354, 2000
        %vm2363 = vcmp.lt.s32.totalorder %v2355, 2000
        %vm2364 = vcmp.lt.s32.totalorder %v2356, 2000
        %vm2365 = vcmp.lt.s32.totalorder %v2357, 2000
        %vm2366 = vcmp.lt.s32.totalorder %v2358, 2000
        %vm2367 = vcmp.lt.s32.totalorder %v2359, 2000
        %vm2368 = vcmp.lt.s32.totalorder %v2360, 2000
        %vm2369 = vcmp.lt.s32.totalorder %v2361, 2000
        %v2370 = vsel %vm2362, %v2335, 0.0
        %v2371 = vsel %vm2363, %v2336, 0.0
        %v2372 = vsel %vm2364, %v2337, 0.0
        %v2373 = vsel %vm2365, %v2338, 0.0
        %v2374 = vsel %vm2366, %v2339, 0.0
        %v2375 = vsel %vm2367, %v2340, 0.0
        %v2376 = vsel %vm2368, %v2341, 0.0
        %v2377 = vsel %vm2369, %v2342, 0.0
        %v2378 = vadd.f32 %v2370, %v2371
        %v2379 = vadd.f32 %v2378, %v2372
        %v2380 = vadd.f32 %v2379, %v2373
        %v2381 = vadd.f32 %v2380, %v2374
        %v2382 = vadd.f32 %v2381, %v2375
        %v2383 = vadd.f32 %v2382, %v2376
        %v2384 = vadd.f32 %v2383, %v2377
        %2385 = vadd.xlane.f32.xlu0 %v2384
        %v2386 = vpop.xlane.xlu0 %2385
        %vm2387 = vcmask 0
        %2388 = vst.msk [vmem:[%s595] sm:$0x1] %vm2387, %v2386
        %s2389 = sand.u32 %s306, 1
        %s2390 = scalar_lea.sflag [#allocation5], %s2389
        %s2391 = sand.u32 %s306, 1
        %s2392 = smul.addr %s2391, 64
        %s2393 = scalar_lea.vmem [#allocation6], %s2392
        %s2394 = sand.u32 %s36, 1
        %s2395 = scalar_lea.sflag [#allocation8], %s2394
        %s2396 = sand.u32 %s332, 1
        %s2397 = smul.addr %s2396, 32
        %s2398 = scalar_lea.vmem [#allocation7], %s2397
        %s2399 = sand.u32 %s36, 1
        %s2400 = scalar_lea.sflag [#allocation8], %s2399
        %s2401 = sand.u32 %s358, 1
        %s2402 = smul.addr %s2401, 32
        %s2403 = scalar_lea.vmem [#allocation9], %s2402
        %p2404 = scmp.lt.s32.totalorder %s36, 1
        %s2405 = scalar_select %p2404, %s36, 1
        %s2406 = scalar_lea.vmem %s15, %s2405
        // Predicated region
        $region96: #{tpu_custom_call.1} parent=86 // pred_check
          %p2407 = pneg %p316
        $region97: #{tpu_custom_call.1} parent=86 // pred_check_branch
          %2409 = sbr.rel (%p2407) target = $region99
        $region98: #{tpu_custom_call.1} parent=86 // pred_region
          %s2410 = smul.u32 8, %s36
          %s2412 = ssub.s32 1024, 1024
          %2413 = vsyncadd %s2390, %s2412
          %s2414 = smul.addr %s2410, 64
          %s2415 = scalar_lea.hbm %s12, %s2414
          %s2416 = sshll.u32 %s2393, 4
          %s2417 = int_to_ptr.vmem [resolvable:$true] %s2416
          %2422 = dma.vmem_to_hbm [thread:$0]  %s2417, 1024, %s2415, %s2390, 512, 1024, 32
        $region99: #{tpu_custom_call.1} parent=86 // pred_fallthru
          _
        // Predicated region
        $region100: #{tpu_custom_call.1} parent=86 // pred_check
          %p2423 = pneg %p342
        $region101: #{tpu_custom_call.1} parent=86 // pred_check_branch
          %2425 = sbr.rel (%p2423) target = $region103
        $region102: #{tpu_custom_call.1} parent=86 // pred_region
          %s2426 = smul.u32 8, %s36
          %s2428 = ssub.s32 512, 512
          %2429 = vsyncadd %s2395, %s2428
          %s2430 = smul.addr %s2426, 64
          %s2431 = scalar_lea.hbm %s13, %s2430
          %s2433 = sshll.u32 %s2398, 4
          %s2434 = int_to_ptr.vmem [resolvable:$true] %s2433
          %2436 = dma.vmem_to_hbm [thread:$0]  %s2434, 512, %s2431, %s2395
        $region103: #{tpu_custom_call.1} parent=86 // pred_fallthru
          _
        // Predicated region
        $region104: #{tpu_custom_call.1} parent=86 // pred_check
          %p2437 = pneg %p368
        $region105: #{tpu_custom_call.1} parent=86 // pred_check_branch
          %2439 = sbr.rel (%p2437) target = $region107
        $region106: #{tpu_custom_call.1} parent=86 // pred_region
          %s2440 = smul.u32 8, %s36
          %s2442 = ssub.s32 512, 512
          %2443 = vsyncadd %s2400, %s2442
          %s2444 = smul.addr %s2440, 64
          %s2445 = scalar_lea.hbm %s14, %s2444
          %s2447 = sshll.u32 %s2403, 4
          %s2448 = int_to_ptr.vmem [resolvable:$true] %s2447
          %2450 = dma.vmem_to_hbm [thread:$0]  %s2448, 512, %s2445, %s2400
        $region107: #{tpu_custom_call.1} parent=86 // pred_fallthru
          _
        // Predicated region
        $region108: #{tpu_custom_call.1} parent=86 // pred_check
          %p2451 = pneg %p394
        $region109: #{tpu_custom_call.1} parent=86 // pred_check_branch
          %2453 = sbr.rel (%p2451) target = $region111
        $region110: #{tpu_custom_call.1} parent=86 // pred_region
          _
        $region111: #{tpu_custom_call.1} parent=86 // pred_fallthru
          _
      $region87: #{tpu_custom_call.1} parent=5 // pred_fallthru
        _
      %p2454 = scmp.le.s32.totalorder 2, %s31
      // Predicated region
      $region112: #{tpu_custom_call.1} parent=5 // pred_check
        %p2455 = pneg %p2454
      $region113: #{tpu_custom_call.1} parent=5 // pred_check_branch
        %2457 = sbr.rel (%p2455) target = $region115
      $region114: #{tpu_custom_call.1} parent=5 // pred_region
        %s2458 = ssub.s32 %s31, 2
        // Predicated region
        $region116: #{tpu_custom_call.1} parent=114 // pred_check
          %p2459 = pneg %p322
        $region117: #{tpu_custom_call.1} parent=114 // pred_check_branch
          %2461 = sbr.rel (%p2459) target = $region119
        $region118: #{tpu_custom_call.1} parent=114 // pred_region
          %s2462 = sand.u32 %s307, 1
          %s2463 = scalar_lea.sflag [#allocation5], %s2462
          %s2464 = sand.u32 %s307, 1
          %s2465 = smul.addr %s2464, 64
          %s2466 = scalar_lea.vmem [#allocation6], %s2465
          %2467 = dma.done %s2463, 1024
        $region119: #{tpu_custom_call.1} parent=114 // pred_fallthru
          _
        // Predicated region
        $region120: #{tpu_custom_call.1} parent=114 // pred_check
          %p2468 = pneg %p348
        $region121: #{tpu_custom_call.1} parent=114 // pred_check_branch
          %2470 = sbr.rel (%p2468) target = $region123
        $region122: #{tpu_custom_call.1} parent=114 // pred_region
          %s2471 = sand.u32 %s37, 1
          %s2472 = scalar_lea.sflag [#allocation8], %s2471
          %s2473 = sand.u32 %s333, 1
          %s2474 = smul.addr %s2473, 32
          %s2475 = scalar_lea.vmem [#allocation7], %s2474
          %2476 = dma.done %s2472, 512
        $region123: #{tpu_custom_call.1} parent=114 // pred_fallthru
          _
        // Predicated region
        $region124: #{tpu_custom_call.1} parent=114 // pred_check
          %p2477 = pneg %p374
        $region125: #{tpu_custom_call.1} parent=114 // pred_check_branch
          %2479 = sbr.rel (%p2477) target = $region127
        $region126: #{tpu_custom_call.1} parent=114 // pred_region
          %s2480 = sand.u32 %s37, 1
          %s2481 = scalar_lea.sflag [#allocation8], %s2480
          %s2482 = sand.u32 %s359, 1
          %s2483 = smul.addr %s2482, 32
          %s2484 = scalar_lea.vmem [#allocation9], %s2483
          %2485 = dma.done %s2481, 512
        $region127: #{tpu_custom_call.1} parent=114 // pred_fallthru
          _
        // Predicated region
        $region128: #{tpu_custom_call.1} parent=114 // pred_check
          %p2486 = pneg %p400
        $region129: #{tpu_custom_call.1} parent=114 // pred_check_branch
          %2488 = sbr.rel (%p2486) target = $region131
        $region130: #{tpu_custom_call.1} parent=114 // pred_region
          %p2489 = scmp.lt.s32.totalorder %s37, 1
          %s2490 = scalar_select %p2489, %s37, 1
          %s2491 = scalar_lea.vmem %s15, %s2490
        $region131: #{tpu_custom_call.1} parent=114 // pred_fallthru
          _
      $region115: #{tpu_custom_call.1} parent=5 // pred_fallthru
        _
    $region6: #{tpu_custom_call.1} parent=1 // loop_footer
      %s35 = sadd.s32 1, %s31
    $region7: #{tpu_custom_call.1} parent=1 // loop_footer_branch
      %30 = sbr.rel target = $region3
    $region8: #{tpu_custom_call.1} parent=1 // loop_exit
      _
    %2492 = vsyncpa [#allocation4], 1
    %s2493 = scalar_lea.sflag [#allocation4], 1
    %2494 = vsyncpa %s2493, 1
    %2495 = vsyncpa [#allocation5], 1
    %s2496 = scalar_lea.sflag [#allocation5], 1
    %2497 = vsyncpa %s2496, 1
    %2498 = vsyncpa [#allocation8], 1
    %s2499 = scalar_lea.sflag [#allocation8], 1
    %2500 = vsyncpa %s2499, 1

</llo_original>
